<compile_context>
chip_gen: v7x
topology: tpu7x:2x2x1
jax: 0.10.0
libtpu: 0.0.40
codegen_flags: <defaults>
</compile_context>

<pallas_src>
import functools
import math

import jax
import jax.numpy as jnp
from jax.experimental import pallas as pl
from jax.experimental.pallas import tpu as pltpu


# ----------------------------------------------------------------------------
# Pallas kernel
# ----------------------------------------------------------------------------
def _mha_kernel(q_ref, k_ref, v_ref,
                wq_ref, bq_ref, wk_ref, bk_ref, wv_ref, bv_ref,
                s_ref, bh_ref, e_ref, wco_ref, bo_ref,
                o_ref, *, scale):
    """One tile of tokens.

    q_ref  : [tn, D]      (input dtype)  query tokens
    k_ref  : [tn, L*D]    (input dtype)  L context positions flattened on lanes
    v_ref  : [tn, L*D]    (input dtype)
    wq_ref : [D,   L*D]   (bf16)  head-block-diag Wq.T, replicated over L
    wk_ref : [L*D, L*D]   (bf16)  (L*H)-block-diag Wk.T
    wv_ref : [L*D, L*D]   (bf16)
    bq/bk/bv : [1, L*D]   (f32)
    s_ref  : [L*D, H*L]   (bf16)  exact 0/1 segment-sum matrix
    bh_ref : [H*L, H*L]   (bf16)  exact 0/1 per-head denominator broadcast
    e_ref  : [H*L, L*D]   (bf16)  exact 0/1 attn -> lane expansion (S.T)
    wco_ref: [L*D, D]     (bf16)  fused (sum over L) @ Wo.T
    bo_ref : [1, D]       (f32)
    o_ref  : [tn, D]
    scale  : python float, 1/sqrt(d_head), applied in f32.
    """
    f32 = jnp.float32
    bf16 = jnp.bfloat16

    # In-kernel cast to bf16 (no wrapper-side HBM astype pass); no-op if the
    # caller already feeds bf16 activations.
    q = q_ref[...].astype(bf16)
    kf = k_ref[...].astype(bf16)
    vf = v_ref[...].astype(bf16)

    # Projections: one lane-dense bf16 MXU matmul each, f32 accumulation.
    q_t = jnp.dot(q, wq_ref[...], preferred_element_type=f32) + bq_ref[...]
    kp = jnp.dot(kf, wk_ref[...], preferred_element_type=f32) + bk_ref[...]
    vp = jnp.dot(vf, wv_ref[...], preferred_element_type=f32) + bv_ref[...]

    # Per-(head, position) scores: elementwise product + 0/1 segment-sum on
    # the MXU (bf16 operands, f32 accumulation); scale applied exactly in f32.
    prod = (q_t * kp).astype(bf16)                                    # [tn, L*D]
    scores = jnp.dot(prod, s_ref[...], preferred_element_type=f32) * scale

    # Softmax over L per head.  The max is taken per row across ALL heads
    # (shift-invariant per head segment).  The denom clamp keeps a fully
    # underflowed head at 0 instead of producing inf/NaN (cheap alternative
    # to a per-head max, per review).
    m = jnp.max(scores, axis=-1, keepdims=True)
    p = jnp.exp(scores - m)
    denom = jnp.dot(p.astype(bf16), bh_ref[...],
                    preferred_element_type=f32)                       # [tn, H*L]
    denom = jnp.maximum(denom, 1e-30)
    # approx reciprocal: ~1e-4-class rel error, fine for eval-mode inference.
    attn = p * pl.reciprocal(denom, approx=True)
    # TODO(synk): attention dropout omitted -- eval-mode identity.

    # Expand attention weights to the [tn, L*D] lane layout (0/1 one-hot
    # matmul), weight V, then the fused (sum over L + output Linear) matmul.
    attn_exp = jnp.dot(attn.astype(bf16), e_ref[...],
                       preferred_element_type=f32)                    # [tn, L*D]
    weighted = (attn_exp * vp).astype(bf16)
    out = jnp.dot(weighted, wco_ref[...], preferred_element_type=f32) + bo_ref[...]
    o_ref[...] = out.astype(o_ref.dtype)


# ----------------------------------------------------------------------------
# Parameter folding -- call ONCE per weight set (hoisted out of the forward).
# ----------------------------------------------------------------------------
def fold_params(raw_params, n_head, L, operand_dtype=jnp.bfloat16):
    """Fold the per-head Linears into block-diagonal lane-dense MXU operands.

    Returns a tuple of arrays that is passed verbatim to mha_forward.  The
    constant 0/1 matrices (S, Bh, E) are exact in bf16; the 1/sqrt(d_head)
    scale is NOT folded here (applied as an f32 scalar inside the kernel).
    """
    Wq, bq, Wk, bk, Wv, bv, Wo, bo = raw_params
    dh = Wq.shape[0]
    H = n_head
    D = dh * H
    LD = L * D
    HL = H * L
    f32 = jnp.float32

    def head_blockdiag(w):  # torch [out, in] -> [D, D];  x @ M == per-head x @ w.T
        return jnp.kron(jnp.eye(H, dtype=f32), w.T.astype(f32))

    # Q: head-block-diag, replicated L times on the output lanes -> the Q
    # projection directly emits the L-tiled [tn, L*D] operand (lane dense).
    wq_t = jnp.tile(head_blockdiag(Wq), (1, L))                        # [D, L*D]
    bq_t = jnp.tile(bq.astype(f32), H * L).reshape(1, LD)

    # K / V: block-diag over L*heads.
    wk_f = jnp.kron(jnp.eye(HL, dtype=f32), Wk.T.astype(f32))          # [L*D, L*D]
    wv_f = jnp.kron(jnp.eye(HL, dtype=f32), Wv.T.astype(f32))
    bk_f = jnp.tile(bk.astype(f32), H * L).reshape(1, LD)
    bv_f = jnp.tile(bv.astype(f32), H * L).reshape(1, LD)

    # Constant 0/1 segment matrices; score layout is head-major: col = h*L + l.
    idx = jnp.arange(LD)
    l_idx = idx // D
    h_idx = (idx % D) // dh
    col = h_idx * L + l_idx
    s_mat = jax.nn.one_hot(col, HL, dtype=f32)                         # [L*D, H*L]
    e_mat = s_mat.T                                                    # [H*L, L*D]
    bh_mat = jnp.kron(jnp.eye(H, dtype=f32), jnp.ones((L, L), f32))    # [H*L, H*L]

    # Fused (sum over L) @ Wo.T and output bias.
    wco = jnp.tile(Wo.T.astype(f32), (L, 1))                           # [L*D, D]
    bo_t = bo.astype(f32).reshape(1, D)

    cast = lambda a: a.astype(operand_dtype)
    return (cast(wq_t), bq_t, cast(wk_f), bk_f, cast(wv_f), bv_f,
            cast(s_mat), cast(bh_mat), cast(e_mat), cast(wco), bo_t)


def _pick_tile_n(N, tile_n_max):
    """Token-tile size: multiple of 8, <= tile_n_max, and producing >= 2 grid
    steps whenever there is enough work (keeps both v7x TensorCores busy)."""
    if N % 8 != 0:
        return N                              # single full-extent block
    t = max(8, (min(tile_n_max, N) // 8) * 8)
    if t >= N and N >= 16:
        t = max(8, ((N // 2) // 8) * 8)
    return t


# ----------------------------------------------------------------------------
# Wrapper
# ----------------------------------------------------------------------------
def mha_forward(q, k, v, folded, *, tile_n_max=2048, out_dtype=None,
                vmem_limit_bytes=48 * 1024 * 1024):
    """q: [B, T, 1, D], k/v: [B, T, L, D] -> [B, T, D].

    `folded` comes from fold_params (computed once per weight set).
    `out_dtype` defaults to q.dtype; pass jnp.bfloat16 if downstream accepts
    it to save ~half of the output HBM traffic.
    """
    B, T, _, D = q.shape
    L = k.shape[2]
    N = B * T
    LD = L * D
    HL = folded[6].shape[1]          # s_mat: [L*D, H*L]
    H = HL // L
    dh = D // H
    out_dtype = q.dtype if out_dtype is None else out_dtype

    # Pure contiguous reshapes -- no dtype cast, no padding.  The kernel casts
    # to bf16 internally; a ragged final tile is handled by Pallas block
    # masking (padded reads, dropped out-of-bounds writes).
    q2 = q.reshape(N, D)
    k2 = k.reshape(N, LD)
    v2 = v.reshape(N, LD)

    tile_n = _pick_tile_n(N, tile_n_max)
    grid = (pl.cdiv(N, tile_n),)

    kernel = functools.partial(_mha_kernel, scale=1.0 / math.sqrt(dh))
    full = lambda i: (0, 0)
    out = pl.pallas_call(
        kernel,
        out_shape=jax.ShapeDtypeStruct((N, D), out_dtype),
        grid_spec=pltpu.PrefetchScalarGridSpec(
            num_scalar_prefetch=0,
            grid=grid,
            in_specs=[
                pl.BlockSpec((tile_n, D), lambda i: (i, 0)),    # q
                pl.BlockSpec((tile_n, LD), lambda i: (i, 0)),   # k (flattened)
                pl.BlockSpec((tile_n, LD), lambda i: (i, 0)),   # v (flattened)
                pl.BlockSpec((D, LD), full),                    # wq_t  (bf16)
                pl.BlockSpec((1, LD), full),                    # bq_t  (f32)
                pl.BlockSpec((LD, LD), full),                   # wk_f  (bf16)
                pl.BlockSpec((1, LD), full),                    # bk_f  (f32)
                pl.BlockSpec((LD, LD), full),                   # wv_f  (bf16)
                pl.BlockSpec((1, LD), full),                    # bv_f  (f32)
                pl.BlockSpec((LD, HL), full),                   # S     (bf16 0/1)
                pl.BlockSpec((HL, HL), full),                   # Bh    (bf16 0/1)
                pl.BlockSpec((HL, LD), full),                   # E     (bf16 0/1)
                pl.BlockSpec((LD, D), full),                    # wco   (bf16)
                pl.BlockSpec((1, D), full),                     # bo    (f32)
            ],
            out_specs=pl.BlockSpec((tile_n, D), lambda i: (i, 0)),
        ),
        compiler_params=pltpu.CompilerParams(
            dimension_semantics=("parallel",),
            vmem_limit_bytes=vmem_limit_bytes),
    )(q2, k2, v2, *folded)

    return out.reshape(B, T, D)


# ----------------------------------------------------------------------------
# Deterministic parameter init (mimics nn.Linear default init).
# ----------------------------------------------------------------------------
def init_params(key, n_head, n_feat):
    d_head = n_feat // n_head

    def linear(kw, kb, fan_in, out_dim, in_dim):
        bound = 1.0 / math.sqrt(fan_in)
        w = jax.random.uniform(kw, (out_dim, in_dim), jnp.float32, -bound, bound)
        b = jax.random.uniform(kb, (out_dim,), jnp.float32, -bound, bound)
        return w, b

    keys = jax.random.split(key, 8)
    Wq, bq = linear(keys[0], keys[1], d_head, d_head, d_head)
    Wk, bk = linear(keys[2], keys[3], d_head, d_head, d_head)
    Wv, bv = linear(keys[4], keys[5], d_head, d_head, d_head)
    Wo, bo = linear(keys[6], keys[7], n_feat, n_feat, n_feat)
    return (Wq, bq, Wk, bk, Wv, bv, Wo, bo)


# ----------------------------------------------------------------------------
# Pure-JAX reference mirroring the torch forward (eval mode, f32).
# ----------------------------------------------------------------------------
def reference(q, k, v, raw_params, n_head):
    Wq, bq, Wk, bk, Wv, bv, Wo, bo = raw_params
    B, T, _, D = q.shape
    dh = D // n_head
    qh = q.reshape(B, T, 1, n_head, dh) @ Wq.T + bq
    kh = k.reshape(B, T, -1, n_head, dh) @ Wk.T + bk
    vh = v.reshape(B, T, -1, n_head, dh) @ Wv.T + bv
    qh = jnp.swapaxes(qh, -2, -3)      # [B,T,H,1,dh]
    kh = jnp.swapaxes(kh, -2, -3)      # [B,T,H,L,dh]
    vh = jnp.swapaxes(vh, -2, -3)
    attw = qh @ jnp.swapaxes(kh, -1, -2) / math.sqrt(dh)
    attn = jax.nn.softmax(attw, axis=-1)
    ct = jnp.squeeze(attn @ vh, -2).reshape(B, T, D)
    return ct @ Wo.T + bo


if __name__ == "__main__":
    B, T, L = 2, 8, 4
    n_head, n_feat = 4, 32

    key = jax.random.PRNGKey(0)
    kparam, kq, kk, kv = jax.random.split(key, 4)
    params = init_params(kparam, n_head, n_feat)

    q = jax.random.normal(kq, (B, T, 1, n_feat), dtype=jnp.float32)
    k = jax.random.normal(kk, (B, T, L, n_feat), dtype=jnp.float32)
    v = jax.random.normal(kv, (B, T, L, n_feat), dtype=jnp.float32)

    # Round the MXU operands to bf16-representable values once so the bf16
    # kernel and the f32 reference consume identical numbers (isolates kernel
    # math from dtype policy); biases stay full f32 in both.
    rb = lambda a: a.astype(jnp.bfloat16).astype(jnp.float32)
    q, k, v = rb(q), rb(k), rb(v)
    Wq, bq, Wk, bk, Wv, bv, Wo, bo = params
    params = (rb(Wq), bq, rb(Wk), bk, rb(Wv), bv, rb(Wo), bo)

    folded = fold_params(params, n_head, L)          # once per weight set
    out = jax.block_until_ready(mha_forward(q, k, v, folded))
    ref = jax.block_until_ready(reference(q, k, v, params, n_head))

    assert out.shape == (B, T, n_feat)
    # Tolerance covers bf16 rounding of the in-kernel intermediates
    # (prod / p / attn / weighted), f32 accumulation-order differences and
    # pl.reciprocal(approx=True) in the softmax denominator.
    err = float(jnp.max(jnp.abs(out - ref)))
    assert jnp.allclose(out, ref, rtol=2e-2, atol=2e-2), err
    print("KERNEL_OK")
</pallas_src>

<mosaic_0001>
module attributes {stable_mosaic.version = 11 : i64} {
  func.func @_mha_kernel(%arg0: i32, %arg1: memref<8x32xf32, #tpu.memory_space<vmem>>, %arg2: memref<8x128xf32, #tpu.memory_space<vmem>>, %arg3: memref<8x128xf32, #tpu.memory_space<vmem>>, %arg4: memref<32x128xbf16, #tpu.memory_space<vmem>>, %arg5: memref<1x128xf32, #tpu.memory_space<vmem>>, %arg6: memref<128x128xbf16, #tpu.memory_space<vmem>>, %arg7: memref<1x128xf32, #tpu.memory_space<vmem>>, %arg8: memref<128x128xbf16, #tpu.memory_space<vmem>>, %arg9: memref<1x128xf32, #tpu.memory_space<vmem>>, %arg10: memref<128x16xbf16, #tpu.memory_space<vmem>>, %arg11: memref<16x16xbf16, #tpu.memory_space<vmem>>, %arg12: memref<16x128xbf16, #tpu.memory_space<vmem>>, %arg13: memref<128x32xbf16, #tpu.memory_space<vmem>>, %arg14: memref<1x32xf32, #tpu.memory_space<vmem>>, %arg15: memref<8x32xf32, #tpu.memory_space<vmem>>) attributes {dimension_semantics = [#tpu.dimension_semantics<parallel>], iteration_bounds = array<i64: 2>, scalar_prefetch = 0 : i64, scratch_operands = 0 : i64, tpu.core_type = #tpu.core_type<tc>, window_params = [{transform_indices = @transform_0, window_bounds = array<i64: 8, 32>}, {transform_indices = @transform_1, window_bounds = array<i64: 8, 128>}, {transform_indices = @transform_2, window_bounds = array<i64: 8, 128>}, {pipeline_mode = #tpu.pipeline_mode<synchronous>, transform_indices = @transform_3, window_bounds = array<i64: 32, 128>}, {pipeline_mode = #tpu.pipeline_mode<synchronous>, transform_indices = @transform_4, window_bounds = array<i64: 1, 128>}, {pipeline_mode = #tpu.pipeline_mode<synchronous>, transform_indices = @transform_5, window_bounds = array<i64: 128, 128>}, {pipeline_mode = #tpu.pipeline_mode<synchronous>, transform_indices = @transform_6, window_bounds = array<i64: 1, 128>}, {pipeline_mode = #tpu.pipeline_mode<synchronous>, transform_indices = @transform_7, window_bounds = array<i64: 128, 128>}, {pipeline_mode = #tpu.pipeline_mode<synchronous>, transform_indices = @transform_8, window_bounds = array<i64: 1, 128>}, {pipeline_mode = #tpu.pipeline_mode<synchronous>, transform_indices = @transform_9, window_bounds = array<i64: 128, 16>}, {pipeline_mode = #tpu.pipeline_mode<synchronous>, transform_indices = @transform_10, window_bounds = array<i64: 16, 16>}, {pipeline_mode = #tpu.pipeline_mode<synchronous>, transform_indices = @transform_11, window_bounds = array<i64: 16, 128>}, {pipeline_mode = #tpu.pipeline_mode<synchronous>, transform_indices = @transform_12, window_bounds = array<i64: 128, 32>}, {pipeline_mode = #tpu.pipeline_mode<synchronous>, transform_indices = @transform_13, window_bounds = array<i64: 1, 32>}, {transform_indices = @transform_14, window_bounds = array<i64: 8, 32>}]} {
    %c0 = arith.constant 0 : index
    %c0_0 = arith.constant 0 : index
    %0 = vector.load %arg1[%c0, %c0_0] : memref<8x32xf32, #tpu.memory_space<vmem>>, vector<8x32xf32>
    %1 = arith.truncf %0 : vector<8x32xf32> to vector<8x32xbf16>
    %c0_1 = arith.constant 0 : index
    %c0_2 = arith.constant 0 : index
    %2 = vector.load %arg2[%c0_1, %c0_2] : memref<8x128xf32, #tpu.memory_space<vmem>>, vector<8x128xf32>
    %3 = arith.truncf %2 : vector<8x128xf32> to vector<8x128xbf16>
    %c0_3 = arith.constant 0 : index
    %c0_4 = arith.constant 0 : index
    %4 = vector.load %arg3[%c0_3, %c0_4] : memref<8x128xf32, #tpu.memory_space<vmem>>, vector<8x128xf32>
    %5 = arith.truncf %4 : vector<8x128xf32> to vector<8x128xbf16>
    %c0_5 = arith.constant 0 : index
    %c0_6 = arith.constant 0 : index
    %6 = vector.load %arg4[%c0_5, %c0_6] : memref<32x128xbf16, #tpu.memory_space<vmem>>, vector<32x128xbf16>
    %cst = arith.constant dense<0.000000e+00> : vector<8x128xf32>
    %7 = tpu.matmul %1, %6, %cst {dimension_numbers = #tpu.dot_dimension_numbers<[1], [0], [0], [1], [0, 0, 1, 1], [], []>} : vector<8x32xbf16>, vector<32x128xbf16>, vector<8x128xf32> -> vector<8x128xf32>
    %c0_7 = arith.constant 0 : index
    %c0_8 = arith.constant 0 : index
    %8 = vector.load %arg5[%c0_7, %c0_8] : memref<1x128xf32, #tpu.memory_space<vmem>>, vector<1x128xf32>
    %9 = vector.broadcast %8 : vector<1x128xf32> to vector<8x128xf32>
    %10 = arith.addf %7, %9 : vector<8x128xf32>
    %c0_9 = arith.constant 0 : index
    %c0_10 = arith.constant 0 : index
    %11 = vector.load %arg6[%c0_9, %c0_10] : memref<128x128xbf16, #tpu.memory_space<vmem>>, vector<128x128xbf16>
    %cst_11 = arith.constant dense<0.000000e+00> : vector<8x128xf32>
    %12 = tpu.matmul %3, %11, %cst_11 {dimension_numbers = #tpu.dot_dimension_numbers<[1], [0], [0], [1], [0, 0, 1, 1], [], []>} : vector<8x128xbf16>, vector<128x128xbf16>, vector<8x128xf32> -> vector<8x128xf32>
    %c0_12 = arith.constant 0 : index
    %c0_13 = arith.constant 0 : index
    %13 = vector.load %arg7[%c0_12, %c0_13] : memref<1x128xf32, #tpu.memory_space<vmem>>, vector<1x128xf32>
    %14 = vector.broadcast %13 : vector<1x128xf32> to vector<8x128xf32>
    %15 = arith.addf %12, %14 : vector<8x128xf32>
    %c0_14 = arith.constant 0 : index
    %c0_15 = arith.constant 0 : index
    %16 = vector.load %arg8[%c0_14, %c0_15] : memref<128x128xbf16, #tpu.memory_space<vmem>>, vector<128x128xbf16>
    %cst_16 = arith.constant dense<0.000000e+00> : vector<8x128xf32>
    %17 = tpu.matmul %5, %16, %cst_16 {dimension_numbers = #tpu.dot_dimension_numbers<[1], [0], [0], [1], [0, 0, 1, 1], [], []>} : vector<8x128xbf16>, vector<128x128xbf16>, vector<8x128xf32> -> vector<8x128xf32>
    %c0_17 = arith.constant 0 : index
    %c0_18 = arith.constant 0 : index
    %18 = vector.load %arg9[%c0_17, %c0_18] : memref<1x128xf32, #tpu.memory_space<vmem>>, vector<1x128xf32>
    %19 = vector.broadcast %18 : vector<1x128xf32> to vector<8x128xf32>
    %20 = arith.addf %17, %19 : vector<8x128xf32>
    %21 = arith.mulf %10, %15 : vector<8x128xf32>
    %22 = arith.truncf %21 : vector<8x128xf32> to vector<8x128xbf16>
    %c0_19 = arith.constant 0 : index
    %c0_20 = arith.constant 0 : index
    %23 = vector.load %arg10[%c0_19, %c0_20] : memref<128x16xbf16, #tpu.memory_space<vmem>>, vector<128x16xbf16>
    %cst_21 = arith.constant dense<0.000000e+00> : vector<8x16xf32>
    %24 = tpu.matmul %22, %23, %cst_21 {dimension_numbers = #tpu.dot_dimension_numbers<[1], [0], [0], [1], [0, 0, 1, 1], [], []>} : vector<8x128xbf16>, vector<128x16xbf16>, vector<8x16xf32> -> vector<8x16xf32>
    %cst_22 = arith.constant 0.353553385 : f32
    %25 = vector.broadcast %cst_22 : f32 to vector<8x16xf32>
    %26 = arith.mulf %24, %25 : vector<8x16xf32>
    %cst_23 = arith.constant dense<0xFF800000> : vector<8xf32>
    %27 = vector.multi_reduction <maximumf>, %26, %cst_23 [1] : vector<8x16xf32> to vector<8xf32>
    %28 = vector.shape_cast %27 : vector<8xf32> to vector<8x1xf32>
    %29 = vector.broadcast %28 : vector<8x1xf32> to vector<8x16xf32>
    %30 = arith.subf %26, %29 : vector<8x16xf32>
    %31 = math.exp %30 : vector<8x16xf32>
    %32 = arith.truncf %31 : vector<8x16xf32> to vector<8x16xbf16>
    %c0_24 = arith.constant 0 : index
    %c0_25 = arith.constant 0 : index
    %33 = vector.load %arg11[%c0_24, %c0_25] : memref<16x16xbf16, #tpu.memory_space<vmem>>, vector<16x16xbf16>
    %cst_26 = arith.constant dense<0.000000e+00> : vector<8x16xf32>
    %34 = tpu.matmul %32, %33, %cst_26 {dimension_numbers = #tpu.dot_dimension_numbers<[1], [0], [0], [1], [0, 0, 1, 1], [], []>} : vector<8x16xbf16>, vector<16x16xbf16>, vector<8x16xf32> -> vector<8x16xf32>
    %cst_27 = arith.constant 1.000000e-30 : f32
    %35 = vector.broadcast %cst_27 : f32 to vector<8x16xf32>
    %36 = arith.maximumf %34, %35 : vector<8x16xf32>
    %37 = tpu.reciprocal %36 {approx = true} : vector<8x16xf32> -> vector<8x16xf32>
    %38 = arith.mulf %31, %37 : vector<8x16xf32>
    %39 = arith.truncf %38 : vector<8x16xf32> to vector<8x16xbf16>
    %c0_28 = arith.constant 0 : index
    %c0_29 = arith.constant 0 : index
    %40 = vector.load %arg12[%c0_28, %c0_29] : memref<16x128xbf16, #tpu.memory_space<vmem>>, vector<16x128xbf16>
    %cst_30 = arith.constant dense<0.000000e+00> : vector<8x128xf32>
    %41 = tpu.matmul %39, %40, %cst_30 {dimension_numbers = #tpu.dot_dimension_numbers<[1], [0], [0], [1], [0, 0, 1, 1], [], []>} : vector<8x16xbf16>, vector<16x128xbf16>, vector<8x128xf32> -> vector<8x128xf32>
    %42 = arith.mulf %41, %20 : vector<8x128xf32>
    %43 = arith.truncf %42 : vector<8x128xf32> to vector<8x128xbf16>
    %c0_31 = arith.constant 0 : index
    %c0_32 = arith.constant 0 : index
    %44 = vector.load %arg13[%c0_31, %c0_32] : memref<128x32xbf16, #tpu.memory_space<vmem>>, vector<128x32xbf16>
    %cst_33 = arith.constant dense<0.000000e+00> : vector<8x32xf32>
    %45 = tpu.matmul %43, %44, %cst_33 {dimension_numbers = #tpu.dot_dimension_numbers<[1], [0], [0], [1], [0, 0, 1, 1], [], []>} : vector<8x128xbf16>, vector<128x32xbf16>, vector<8x32xf32> -> vector<8x32xf32>
    %c0_34 = arith.constant 0 : index
    %c0_35 = arith.constant 0 : index
    %46 = vector.load %arg14[%c0_34, %c0_35] : memref<1x32xf32, #tpu.memory_space<vmem>>, vector<1x32xf32>
    %47 = vector.broadcast %46 : vector<1x32xf32> to vector<8x32xf32>
    %48 = arith.addf %45, %47 : vector<8x32xf32>
    %c0_36 = arith.constant 0 : index
    %c0_37 = arith.constant 0 : index
    %49 = vector.load %arg15[%c0_36, %c0_37] : memref<8x32xf32, #tpu.memory_space<vmem>>, vector<8x32xf32>
    tpu.vector_store %arg15[%c0_36, %c0_37], %48 {strides = array<i32>} : memref<8x32xf32, #tpu.memory_space<vmem>>, vector<8x32xf32>,
    return
  }
  func.func @transform_0(%arg0: i32) -> (i32, i32) {
    %c0_i32 = arith.constant 0 : i32
    %c0_i32_0 = arith.constant 0 : i32
    return %arg0, %c0_i32 : i32, i32
  }
  func.func @transform_1(%arg0: i32) -> (i32, i32) {
    %c0_i32 = arith.constant 0 : i32
    %c0_i32_0 = arith.constant 0 : i32
    return %arg0, %c0_i32 : i32, i32
  }
  func.func @transform_2(%arg0: i32) -> (i32, i32) {
    %c0_i32 = arith.constant 0 : i32
    %c0_i32_0 = arith.constant 0 : i32
    return %arg0, %c0_i32 : i32, i32
  }
  func.func @transform_3(%arg0: i32) -> (i32, i32) {
    %c0_i32 = arith.constant 0 : i32
    %c0_i32_0 = arith.constant 0 : i32
    %c0_i32_1 = arith.constant 0 : i32
    return %c0_i32, %c0_i32_0 : i32, i32
  }
  func.func @transform_4(%arg0: i32) -> (i32, i32) {
    %c0_i32 = arith.constant 0 : i32
    %c0_i32_0 = arith.constant 0 : i32
    %c0_i32_1 = arith.constant 0 : i32
    return %c0_i32, %c0_i32_0 : i32, i32
  }
  func.func @transform_5(%arg0: i32) -> (i32, i32) {
    %c0_i32 = arith.constant 0 : i32
    %c0_i32_0 = arith.constant 0 : i32
    %c0_i32_1 = arith.constant 0 : i32
    return %c0_i32, %c0_i32_0 : i32, i32
  }
  func.func @transform_6(%arg0: i32) -> (i32, i32) {
    %c0_i32 = arith.constant 0 : i32
    %c0_i32_0 = arith.constant 0 : i32
    %c0_i32_1 = arith.constant 0 : i32
    return %c0_i32, %c0_i32_0 : i32, i32
  }
  func.func @transform_7(%arg0: i32) -> (i32, i32) {
    %c0_i32 = arith.constant 0 : i32
    %c0_i32_0 = arith.constant 0 : i32
    %c0_i32_1 = arith.constant 0 : i32
    return %c0_i32, %c0_i32_0 : i32, i32
  }
  func.func @transform_8(%arg0: i32) -> (i32, i32) {
    %c0_i32 = arith.constant 0 : i32
    %c0_i32_0 = arith.constant 0 : i32
    %c0_i32_1 = arith.constant 0 : i32
    return %c0_i32, %c0_i32_0 : i32, i32
  }
  func.func @transform_9(%arg0: i32) -> (i32, i32) {
    %c0_i32 = arith.constant 0 : i32
    %c0_i32_0 = arith.constant 0 : i32
    %c0_i32_1 = arith.constant 0 : i32
    return %c0_i32, %c0_i32_0 : i32, i32
  }
  func.func @transform_10(%arg0: i32) -> (i32, i32) {
    %c0_i32 = arith.constant 0 : i32
    %c0_i32_0 = arith.constant 0 : i32
    %c0_i32_1 = arith.constant 0 : i32
    return %c0_i32, %c0_i32_0 : i32, i32
  }
  func.func @transform_11(%arg0: i32) -> (i32, i32) {
    %c0_i32 = arith.constant 0 : i32
    %c0_i32_0 = arith.constant 0 : i32
    %c0_i32_1 = arith.constant 0 : i32
    return %c0_i32, %c0_i32_0 : i32, i32
  }
  func.func @transform_12(%arg0: i32) -> (i32, i32) {
    %c0_i32 = arith.constant 0 : i32
    %c0_i32_0 = arith.constant 0 : i32
    %c0_i32_1 = arith.constant 0 : i32
    return %c0_i32, %c0_i32_0 : i32, i32
  }
  func.func @transform_13(%arg0: i32) -> (i32, i32) {
    %c0_i32 = arith.constant 0 : i32
    %c0_i32_0 = arith.constant 0 : i32
    %c0_i32_1 = arith.constant 0 : i32
    return %c0_i32, %c0_i32_0 : i32, i32
  }
  func.func @transform_14(%arg0: i32) -> (i32, i32) {
    %c0_i32 = arith.constant 0 : i32
    %c0_i32_0 = arith.constant 0 : i32
    return %arg0, %c0_i32 : i32, i32
  }
}

</mosaic_0001>

<llo_original>
// kernel: tpu_custom_call.1
$region0: #{tpu_custom_call.1}
  #allocation0 [shape = 'u32[]', space=smem, size = 0x4, offset = 0x4, fixed_abs, tag = 'smem constant byte address 0x4 - core index']
  #allocation1 [shape = 'u32[144,128]{1,0:T(1,128)}', space=vmem, size = 0x12000, scoped, tag = 'internal scratch']
  %s0 = inlined_call_operand.hbm [shape: f32[16,32], index: 0, kind: input, shape index: {}]
  %s1 = inlined_call_operand.hbm [shape: f32[16,128], index: 1, kind: input, shape index: {}]
  %s2 = inlined_call_operand.hbm [shape: f32[16,128], index: 2, kind: input, shape index: {}]
  %s3 = inlined_call_operand.vmem [shape: bf16[32,128], index: 3, kind: input, shape index: {}]
  %s4 = inlined_call_operand.vmem [shape: f32[1,128], index: 4, kind: input, shape index: {}]
  %s5 = inlined_call_operand.vmem [shape: bf16[128,128], index: 5, kind: input, shape index: {}]
  %s6 = inlined_call_operand.vmem [shape: f32[1,128], index: 6, kind: input, shape index: {}]
  %s7 = inlined_call_operand.vmem [shape: bf16[128,128], index: 7, kind: input, shape index: {}]
  %s8 = inlined_call_operand.hbm [shape: f32[1,128], index: 8, kind: input, shape index: {}]
  %s9 = inlined_call_operand.vmem [shape: bf16[128,16], index: 9, kind: input, shape index: {}]
  %s10 = inlined_call_operand.vmem [shape: bf16[16,16], index: 10, kind: input, shape index: {}]
  %s11 = inlined_call_operand.vmem [shape: bf16[16,128], index: 11, kind: input, shape index: {}]
  %s12 = inlined_call_operand.vmem [shape: bf16[128,32], index: 12, kind: input, shape index: {}]
  %s13 = inlined_call_operand.vmem [shape: f32[1,32], index: 13, kind: input, shape index: {}]
  %s14 = inlined_call_operand.hbm [shape: f32[16,32], index: 14, kind: output, shape index: {}]
  %s15 = sld [smem:[#allocation0]]
  $region105: #{tpu_custom_call.1} parent=0
    _
  %s17 = ssub.s32 1, %s15
  %s18 = scalar_select 0, %s17, %s15
  $region1: #{tpu_custom_call.1} parent=0
    #allocation2 [shape = 'u8[8192]{0}', space=vmem, size = 0x2000, scoped, tag = 'input window, operand 0']
    #allocation3 [shape = 's32[2]{0}', space=sflag, size = 0x8, scoped, tag = 'scoped memory for tpu_custom_call.1']
    #allocation4 [shape = 's32[2]{0}', space=sflag, size = 0x8, scoped, tag = 'scoped memory for tpu_custom_call.1']
    #allocation5 [shape = 'u8[8192]{0}', space=vmem, size = 0x2000, scoped, tag = 'input window, operand 1']
    #allocation6 [shape = 's32[2]{0}', space=sflag, size = 0x8, scoped, tag = 'scoped memory for tpu_custom_call.1']
    #allocation7 [shape = 'u8[8192]{0}', space=vmem, size = 0x2000, scoped, tag = 'input window, operand 2']
    #allocation8 [shape = 'u8[512]{0}', space=vmem, size = 0x400, scoped, tag = 'input window, operand 8, single buffered']
    #allocation9 [shape = 's32[1]{0}', space=sflag, size = 0x4, scoped, tag = 'scoped memory for tpu_custom_call.1']
    #allocation10 [shape = 'u8[8192]{0}', space=vmem, size = 0x2000, scoped, tag = 'output window, operand 0']
    %19 = vsyncpa [#allocation3], 0
    %s20 = scalar_lea.sflag [#allocation3], 1
    %21 = vsyncpa %s20, 0
    %22 = vsyncpa [#allocation6], 0
    %s23 = scalar_lea.sflag [#allocation6], 1
    %24 = vsyncpa %s23, 0
    %25 = vsyncpa [#allocation9], 0
    %26 = vsyncpa [#allocation4], 0
    %s27 = scalar_lea.sflag [#allocation4], 1
    %28 = vsyncpa %s27, 0
    loop: start=0, step=1, limit=4
    $region2: #{tpu_custom_call.1} parent=1 // loop_pre_header
      _
    $region3: #{tpu_custom_call.1} parent=1 // loop_header
      %s30 = sphi 0, %s34
      %p31 = scmp.ge.s32.totalorder %s30, 4
      %s40 = sphi 0, %s42
      %s43 = sphi 0, %s40
      %s44 = sphi 0, %s43
      %s60 = sphi 0, %s44
      %s66 = sphi 0, %s68
      %s69 = sphi 0, %s66
      %s70 = sphi 0, %s69
      %s86 = sphi 0, %s70
      %s92 = sphi 0, %s94
      %s95 = sphi 0, %s92
      %s96 = sphi 0, %s95
      %s112 = sphi 0, %s96
      %s116 = sphi 0, %s116
      %s118 = sphi 0, %s116
      %s119 = sphi 0, %s118
      %s133 = sphi 0, %s119
      %s137 = sphi 0, %s137
      %s139 = sphi 0, %s137
      %s140 = sphi 0, %s139
      %s154 = sphi 0, %s140
      %s158 = sphi 0, %s158
      %s160 = sphi 0, %s158
      %s161 = sphi 0, %s160
      %s175 = sphi 0, %s161
      %s179 = sphi 0, %s179
      %s181 = sphi 0, %s179
      %s182 = sphi 0, %s181
      %s196 = sphi 0, %s182
      %s200 = sphi 0, %s200
      %s202 = sphi 0, %s200
      %s203 = sphi 0, %s202
      %s217 = sphi 0, %s203
      %s221 = sphi 0, %s221
      %s223 = sphi 0, %s221
      %s224 = sphi 0, %s223
      %s238 = sphi 0, %s224
      %s242 = sphi 0, %s242
      %s244 = sphi 0, %s242
      %s245 = sphi 0, %s244
      %s259 = sphi 0, %s245
      %s263 = sphi 0, %s263
      %s265 = sphi 0, %s263
      %s266 = sphi 0, %s265
      %s280 = sphi 0, %s266
      %s284 = sphi 0, %s284
      %s286 = sphi 0, %s284
      %s287 = sphi 0, %s286
      %s301 = sphi 0, %s287
      %s305 = sphi 0, %s305
      %s307 = sphi 0, %s305
      %s308 = sphi 0, %s307
      %s322 = sphi 0, %s308
      %s326 = sphi 0, %s326
      %s328 = sphi 0, %s326
      %s329 = sphi 0, %s328
      %s343 = sphi 0, %s329
      %s349 = sphi 0, %s351
      %s352 = sphi 0, %s349
      %s353 = sphi 0, %s352
      %s369 = sphi 0, %s353
    $region4: #{tpu_custom_call.1} parent=1 // loop_header_branch
      %33 = sbr.rel (%p31) target = $region8
    $region5: #{tpu_custom_call.1} parent=1 // loop_body
      %s35 = ssub.s32 %s30, 1
      %s36 = ssub.s32 %s30, 2
      %s37 = sadd.s32 %s30, 1
      %s38 = ssub.s32 %s30, %s37
      %p39 = scmp.eq.s32.totalorder %s38, 0
      %s41 = sadd.s32 %s40, 1
      %s42 = scalar_select %p39, %s40, %s41
      %p45 = pneg %p39
      %p46 = scmp.eq.s32.totalorder %s30, 1
      %p47 = por %p45, %p46
      %p48 = scmp.ne.s32.totalorder %s40, %s43
      %p49 = scmp.eq.s32.totalorder %s30, 0
      %p50 = por %p48, %p49
      %p51 = scmp.ne.s32.totalorder %s40, %s43
      %p52 = scmp.eq.s32.totalorder %s35, 1
      %p53 = por %p51, %p52
      %p54 = scmp.ne.s32.totalorder %s43, %s44
      %p55 = scmp.eq.s32.totalorder %s35, 0
      %p56 = por %p54, %p55
      %p57 = scmp.ne.s32.totalorder %s43, %s44
      %p58 = scmp.eq.s32.totalorder %s36, 1
      %p59 = por %p57, %p58
      %p61 = scmp.ne.s32.totalorder %s44, %s60
      %p62 = scmp.eq.s32.totalorder %s36, 0
      %p63 = por %p61, %p62
      %s64 = ssub.s32 %s30, %s37
      %p65 = scmp.eq.s32.totalorder %s64, 0
      %s67 = sadd.s32 %s66, 1
      %s68 = scalar_select %p65, %s66, %s67
      %p71 = pneg %p65
      %p72 = scmp.eq.s32.totalorder %s30, 1
      %p73 = por %p71, %p72
      %p74 = scmp.ne.s32.totalorder %s66, %s69
      %p75 = scmp.eq.s32.totalorder %s30, 0
      %p76 = por %p74, %p75
      %p77 = scmp.ne.s32.totalorder %s66, %s69
      %p78 = scmp.eq.s32.totalorder %s35, 1
      %p79 = por %p77, %p78
      %p80 = scmp.ne.s32.totalorder %s69, %s70
      %p81 = scmp.eq.s32.totalorder %s35, 0
      %p82 = por %p80, %p81
      %p83 = scmp.ne.s32.totalorder %s69, %s70
      %p84 = scmp.eq.s32.totalorder %s36, 1
      %p85 = por %p83, %p84
      %p87 = scmp.ne.s32.totalorder %s70, %s86
      %p88 = scmp.eq.s32.totalorder %s36, 0
      %p89 = por %p87, %p88
      %s90 = ssub.s32 %s30, %s37
      %p91 = scmp.eq.s32.totalorder %s90, 0
      %s93 = sadd.s32 %s92, 1
      %s94 = scalar_select %p91, %s92, %s93
      %p97 = pneg %p91
      %p98 = scmp.eq.s32.totalorder %s30, 1
      %p99 = por %p97, %p98
      %p100 = scmp.ne.s32.totalorder %s92, %s95
      %p101 = scmp.eq.s32.totalorder %s30, 0
      %p102 = por %p100, %p101
      %p103 = scmp.ne.s32.totalorder %s92, %s95
      %p104 = scmp.eq.s32.totalorder %s35, 1
      %p105 = por %p103, %p104
      %p106 = scmp.ne.s32.totalorder %s95, %s96
      %p107 = scmp.eq.s32.totalorder %s35, 0
      %p108 = por %p106, %p107
      %p109 = scmp.ne.s32.totalorder %s95, %s96
      %p110 = scmp.eq.s32.totalorder %s36, 1
      %p111 = por %p109, %p110
      %p113 = scmp.ne.s32.totalorder %s96, %s112
      %p114 = scmp.eq.s32.totalorder %s36, 0
      %p115 = por %p113, %p114
      %s117 = sadd.s32 %s116, 1
      %p120 = scmp.eq.s32.totalorder %s30, 1
      %p121 = scmp.ne.s32.totalorder %s116, %s118
      %p122 = scmp.eq.s32.totalorder %s30, 0
      %p123 = por %p121, %p122
      %p124 = scmp.ne.s32.totalorder %s116, %s118
      %p125 = scmp.eq.s32.totalorder %s35, 1
      %p126 = por %p124, %p125
      %p127 = scmp.ne.s32.totalorder %s118, %s119
      %p128 = scmp.eq.s32.totalorder %s35, 0
      %p129 = por %p127, %p128
      %p130 = scmp.ne.s32.totalorder %s118, %s119
      %p131 = scmp.eq.s32.totalorder %s36, 1
      %p132 = por %p130, %p131
      %p134 = scmp.ne.s32.totalorder %s119, %s133
      %p135 = scmp.eq.s32.totalorder %s36, 0
      %p136 = por %p134, %p135
      %s138 = sadd.s32 %s137, 1
      %p141 = scmp.eq.s32.totalorder %s30, 1
      %p142 = scmp.ne.s32.totalorder %s137, %s139
      %p143 = scmp.eq.s32.totalorder %s30, 0
      %p144 = por %p142, %p143
      %p145 = scmp.ne.s32.totalorder %s137, %s139
      %p146 = scmp.eq.s32.totalorder %s35, 1
      %p147 = por %p145, %p146
      %p148 = scmp.ne.s32.totalorder %s139, %s140
      %p149 = scmp.eq.s32.totalorder %s35, 0
      %p150 = por %p148, %p149
      %p151 = scmp.ne.s32.totalorder %s139, %s140
      %p152 = scmp.eq.s32.totalorder %s36, 1
      %p153 = por %p151, %p152
      %p155 = scmp.ne.s32.totalorder %s140, %s154
      %p156 = scmp.eq.s32.totalorder %s36, 0
      %p157 = por %p155, %p156
      %s159 = sadd.s32 %s158, 1
      %p162 = scmp.eq.s32.totalorder %s30, 1
      %p163 = scmp.ne.s32.totalorder %s158, %s160
      %p164 = scmp.eq.s32.totalorder %s30, 0
      %p165 = por %p163, %p164
      %p166 = scmp.ne.s32.totalorder %s158, %s160
      %p167 = scmp.eq.s32.totalorder %s35, 1
      %p168 = por %p166, %p167
      %p169 = scmp.ne.s32.totalorder %s160, %s161
      %p170 = scmp.eq.s32.totalorder %s35, 0
      %p171 = por %p169, %p170
      %p172 = scmp.ne.s32.totalorder %s160, %s161
      %p173 = scmp.eq.s32.totalorder %s36, 1
      %p174 = por %p172, %p173
      %p176 = scmp.ne.s32.totalorder %s161, %s175
      %p177 = scmp.eq.s32.totalorder %s36, 0
      %p178 = por %p176, %p177
      %s180 = sadd.s32 %s179, 1
      %p183 = scmp.eq.s32.totalorder %s30, 1
      %p184 = scmp.ne.s32.totalorder %s179, %s181
      %p185 = scmp.eq.s32.totalorder %s30, 0
      %p186 = por %p184, %p185
      %p187 = scmp.ne.s32.totalorder %s179, %s181
      %p188 = scmp.eq.s32.totalorder %s35, 1
      %p189 = por %p187, %p188
      %p190 = scmp.ne.s32.totalorder %s181, %s182
      %p191 = scmp.eq.s32.totalorder %s35, 0
      %p192 = por %p190, %p191
      %p193 = scmp.ne.s32.totalorder %s181, %s182
      %p194 = scmp.eq.s32.totalorder %s36, 1
      %p195 = por %p193, %p194
      %p197 = scmp.ne.s32.totalorder %s182, %s196
      %p198 = scmp.eq.s32.totalorder %s36, 0
      %p199 = por %p197, %p198
      %s201 = sadd.s32 %s200, 1
      %p204 = scmp.eq.s32.totalorder %s30, 1
      %p205 = scmp.ne.s32.totalorder %s200, %s202
      %p206 = scmp.eq.s32.totalorder %s30, 0
      %p207 = por %p205, %p206
      %p208 = scmp.ne.s32.totalorder %s200, %s202
      %p209 = scmp.eq.s32.totalorder %s35, 1
      %p210 = por %p208, %p209
      %p211 = scmp.ne.s32.totalorder %s202, %s203
      %p212 = scmp.eq.s32.totalorder %s35, 0
      %p213 = por %p211, %p212
      %p214 = scmp.ne.s32.totalorder %s202, %s203
      %p215 = scmp.eq.s32.totalorder %s36, 1
      %p216 = por %p214, %p215
      %p218 = scmp.ne.s32.totalorder %s203, %s217
      %p219 = scmp.eq.s32.totalorder %s36, 0
      %p220 = por %p218, %p219
      %s222 = sadd.s32 %s221, 1
      %p225 = scmp.eq.s32.totalorder %s30, 1
      %p226 = scmp.ne.s32.totalorder %s221, %s223
      %p227 = scmp.eq.s32.totalorder %s30, 0
      %p228 = por %p226, %p227
      %p229 = scmp.ne.s32.totalorder %s221, %s223
      %p230 = scmp.eq.s32.totalorder %s35, 1
      %p231 = por %p229, %p230
      %p232 = scmp.ne.s32.totalorder %s223, %s224
      %p233 = scmp.eq.s32.totalorder %s35, 0
      %p234 = por %p232, %p233
      %p235 = scmp.ne.s32.totalorder %s223, %s224
      %p236 = scmp.eq.s32.totalorder %s36, 1
      %p237 = por %p235, %p236
      %p239 = scmp.ne.s32.totalorder %s224, %s238
      %p240 = scmp.eq.s32.totalorder %s36, 0
      %p241 = por %p239, %p240
      %s243 = sadd.s32 %s242, 1
      %p246 = scmp.eq.s32.totalorder %s30, 1
      %p247 = scmp.ne.s32.totalorder %s242, %s244
      %p248 = scmp.eq.s32.totalorder %s30, 0
      %p249 = por %p247, %p248
      %p250 = scmp.ne.s32.totalorder %s242, %s244
      %p251 = scmp.eq.s32.totalorder %s35, 1
      %p252 = por %p250, %p251
      %p253 = scmp.ne.s32.totalorder %s244, %s245
      %p254 = scmp.eq.s32.totalorder %s35, 0
      %p255 = por %p253, %p254
      %p256 = scmp.ne.s32.totalorder %s244, %s245
      %p257 = scmp.eq.s32.totalorder %s36, 1
      %p258 = por %p256, %p257
      %p260 = scmp.ne.s32.totalorder %s245, %s259
      %p261 = scmp.eq.s32.totalorder %s36, 0
      %p262 = por %p260, %p261
      %s264 = sadd.s32 %s263, 1
      %p267 = scmp.eq.s32.totalorder %s30, 1
      %p268 = scmp.ne.s32.totalorder %s263, %s265
      %p269 = scmp.eq.s32.totalorder %s30, 0
      %p270 = por %p268, %p269
      %p271 = scmp.ne.s32.totalorder %s263, %s265
      %p272 = scmp.eq.s32.totalorder %s35, 1
      %p273 = por %p271, %p272
      %p274 = scmp.ne.s32.totalorder %s265, %s266
      %p275 = scmp.eq.s32.totalorder %s35, 0
      %p276 = por %p274, %p275
      %p277 = scmp.ne.s32.totalorder %s265, %s266
      %p278 = scmp.eq.s32.totalorder %s36, 1
      %p279 = por %p277, %p278
      %p281 = scmp.ne.s32.totalorder %s266, %s280
      %p282 = scmp.eq.s32.totalorder %s36, 0
      %p283 = por %p281, %p282
      %s285 = sadd.s32 %s284, 1
      %p288 = scmp.eq.s32.totalorder %s30, 1
      %p289 = scmp.ne.s32.totalorder %s284, %s286
      %p290 = scmp.eq.s32.totalorder %s30, 0
      %p291 = por %p289, %p290
      %p292 = scmp.ne.s32.totalorder %s284, %s286
      %p293 = scmp.eq.s32.totalorder %s35, 1
      %p294 = por %p292, %p293
      %p295 = scmp.ne.s32.totalorder %s286, %s287
      %p296 = scmp.eq.s32.totalorder %s35, 0
      %p297 = por %p295, %p296
      %p298 = scmp.ne.s32.totalorder %s286, %s287
      %p299 = scmp.eq.s32.totalorder %s36, 1
      %p300 = por %p298, %p299
      %p302 = scmp.ne.s32.totalorder %s287, %s301
      %p303 = scmp.eq.s32.totalorder %s36, 0
      %p304 = por %p302, %p303
      %s306 = sadd.s32 %s305, 1
      %p309 = scmp.eq.s32.totalorder %s30, 1
      %p310 = scmp.ne.s32.totalorder %s305, %s307
      %p311 = scmp.eq.s32.totalorder %s30, 0
      %p312 = por %p310, %p311
      %p313 = scmp.ne.s32.totalorder %s305, %s307
      %p314 = scmp.eq.s32.totalorder %s35, 1
      %p315 = por %p313, %p314
      %p316 = scmp.ne.s32.totalorder %s307, %s308
      %p317 = scmp.eq.s32.totalorder %s35, 0
      %p318 = por %p316, %p317
      %p319 = scmp.ne.s32.totalorder %s307, %s308
      %p320 = scmp.eq.s32.totalorder %s36, 1
      %p321 = por %p319, %p320
      %p323 = scmp.ne.s32.totalorder %s308, %s322
      %p324 = scmp.eq.s32.totalorder %s36, 0
      %p325 = por %p323, %p324
      %s327 = sadd.s32 %s326, 1
      %p330 = scmp.eq.s32.totalorder %s30, 1
      %p331 = scmp.ne.s32.totalorder %s326, %s328
      %p332 = scmp.eq.s32.totalorder %s30, 0
      %p333 = por %p331, %p332
      %p334 = scmp.ne.s32.totalorder %s326, %s328
      %p335 = scmp.eq.s32.totalorder %s35, 1
      %p336 = por %p334, %p335
      %p337 = scmp.ne.s32.totalorder %s328, %s329
      %p338 = scmp.eq.s32.totalorder %s35, 0
      %p339 = por %p337, %p338
      %p340 = scmp.ne.s32.totalorder %s328, %s329
      %p341 = scmp.eq.s32.totalorder %s36, 1
      %p342 = por %p340, %p341
      %p344 = scmp.ne.s32.totalorder %s329, %s343
      %p345 = scmp.eq.s32.totalorder %s36, 0
      %p346 = por %p344, %p345
      %s347 = ssub.s32 %s30, %s37
      %p348 = scmp.eq.s32.totalorder %s347, 0
      %s350 = sadd.s32 %s349, 1
      %s351 = scalar_select %p348, %s349, %s350
      %p354 = pneg %p348
      %p355 = scmp.eq.s32.totalorder %s30, 1
      %p356 = por %p354, %p355
      %p357 = scmp.ne.s32.totalorder %s349, %s352
      %p358 = scmp.eq.s32.totalorder %s30, 0
      %p359 = por %p357, %p358
      %p360 = scmp.ne.s32.totalorder %s349, %s352
      %p361 = scmp.eq.s32.totalorder %s35, 1
      %p362 = por %p360, %p361
      %p363 = scmp.ne.s32.totalorder %s352, %s353
      %p364 = scmp.eq.s32.totalorder %s35, 0
      %p365 = por %p363, %p364
      %p366 = scmp.ne.s32.totalorder %s352, %s353
      %p367 = scmp.eq.s32.totalorder %s36, 1
      %p368 = por %p366, %p367
      %p370 = scmp.ne.s32.totalorder %s353, %s369
      %p371 = scmp.eq.s32.totalorder %s36, 0
      %p372 = por %p370, %p371
      %p373 = scmp.le.s32.totalorder 1, %s30
      %p374 = scmp.lt.s32.totalorder %s30, 3
      %p375 = pnand %p373, %p374
      %p376 = pneg %p375
      // Predicated region
      $region9: #{tpu_custom_call.1} parent=5 // pred_check
        _
      $region10: #{tpu_custom_call.1} parent=5 // pred_check_branch
        %378 = sbr.rel (%p375) target = $region12
      $region11: #{tpu_custom_call.1} parent=5 // pred_region
        %s379 = ssub.s32 %s30, 1
        // Predicated region
        $region13: #{tpu_custom_call.1} parent=11 // pred_check
          %p380 = pneg %p129
        $region14: #{tpu_custom_call.1} parent=11 // pred_check_branch
          %382 = sbr.rel (%p380) target = $region16
        $region15: #{tpu_custom_call.1} parent=11 // pred_region
          _
        $region16: #{tpu_custom_call.1} parent=11 // pred_fallthru
          _
        // Predicated region
        $region17: #{tpu_custom_call.1} parent=11 // pred_check
          %p383 = pneg %p150
        $region18: #{tpu_custom_call.1} parent=11 // pred_check_branch
          %385 = sbr.rel (%p383) target = $region20
        $region19: #{tpu_custom_call.1} parent=11 // pred_region
          _
        $region20: #{tpu_custom_call.1} parent=11 // pred_fallthru
          _
        // Predicated region
        $region21: #{tpu_custom_call.1} parent=11 // pred_check
          %p386 = pneg %p171
        $region22: #{tpu_custom_call.1} parent=11 // pred_check_branch
          %388 = sbr.rel (%p386) target = $region24
        $region23: #{tpu_custom_call.1} parent=11 // pred_region
          _
        $region24: #{tpu_custom_call.1} parent=11 // pred_fallthru
          _
        // Predicated region
        $region25: #{tpu_custom_call.1} parent=11 // pred_check
          %p389 = pneg %p192
        $region26: #{tpu_custom_call.1} parent=11 // pred_check_branch
          %391 = sbr.rel (%p389) target = $region28
        $region27: #{tpu_custom_call.1} parent=11 // pred_region
          _
        $region28: #{tpu_custom_call.1} parent=11 // pred_fallthru
          _
        // Predicated region
        $region29: #{tpu_custom_call.1} parent=11 // pred_check
          %p392 = pneg %p213
        $region30: #{tpu_custom_call.1} parent=11 // pred_check_branch
          %394 = sbr.rel (%p392) target = $region32
        $region31: #{tpu_custom_call.1} parent=11 // pred_region
          _
        $region32: #{tpu_custom_call.1} parent=11 // pred_fallthru
          _
        // Predicated region
        $region33: #{tpu_custom_call.1} parent=11 // pred_check
          %p395 = pneg %p234
        $region34: #{tpu_custom_call.1} parent=11 // pred_check_branch
          %397 = sbr.rel (%p395) target = $region36
        $region35: #{tpu_custom_call.1} parent=11 // pred_region
          %s399 = ssub.s32 16, 16
          %400 = vsyncadd [#allocation9], %s399
          %s402 = sshll.u32 [#allocation8], 4
          %s403 = int_to_ptr.vmem [resolvable:$true] %s402
          %405 = dma.hbm_to_vmem [thread:$0]  %s8, 16, %s403, [#allocation9]
        $region36: #{tpu_custom_call.1} parent=11 // pred_fallthru
          _
        // Predicated region
        $region37: #{tpu_custom_call.1} parent=11 // pred_check
          %p406 = pneg %p255
        $region38: #{tpu_custom_call.1} parent=11 // pred_check_branch
          %408 = sbr.rel (%p406) target = $region40
        $region39: #{tpu_custom_call.1} parent=11 // pred_region
          _
        $region40: #{tpu_custom_call.1} parent=11 // pred_fallthru
          _
        // Predicated region
        $region41: #{tpu_custom_call.1} parent=11 // pred_check
          %p409 = pneg %p276
        $region42: #{tpu_custom_call.1} parent=11 // pred_check_branch
          %411 = sbr.rel (%p409) target = $region44
        $region43: #{tpu_custom_call.1} parent=11 // pred_region
          _
        $region44: #{tpu_custom_call.1} parent=11 // pred_fallthru
          _
        // Predicated region
        $region45: #{tpu_custom_call.1} parent=11 // pred_check
          %p412 = pneg %p297
        $region46: #{tpu_custom_call.1} parent=11 // pred_check_branch
          %414 = sbr.rel (%p412) target = $region48
        $region47: #{tpu_custom_call.1} parent=11 // pred_region
          _
        $region48: #{tpu_custom_call.1} parent=11 // pred_fallthru
          _
        // Predicated region
        $region49: #{tpu_custom_call.1} parent=11 // pred_check
          %p415 = pneg %p318
        $region50: #{tpu_custom_call.1} parent=11 // pred_check_branch
          %417 = sbr.rel (%p415) target = $region52
        $region51: #{tpu_custom_call.1} parent=11 // pred_region
          _
        $region52: #{tpu_custom_call.1} parent=11 // pred_fallthru
          _
        // Predicated region
        $region53: #{tpu_custom_call.1} parent=11 // pred_check
          %p418 = pneg %p339
        $region54: #{tpu_custom_call.1} parent=11 // pred_check_branch
          %420 = sbr.rel (%p418) target = $region56
        $region55: #{tpu_custom_call.1} parent=11 // pred_region
          _
        $region56: #{tpu_custom_call.1} parent=11 // pred_fallthru
          _
      $region12: #{tpu_custom_call.1} parent=5 // pred_fallthru
        _
      %p421 = scmp.lt.s32.totalorder %s30, 2
      // Predicated region
      $region57: #{tpu_custom_call.1} parent=5 // pred_check
        %p422 = pneg %p421
      $region58: #{tpu_custom_call.1} parent=5 // pred_check_branch
        %424 = sbr.rel (%p422) target = $region60
      $region59: #{tpu_custom_call.1} parent=5 // pred_region
        // Predicated region
        $region61: #{tpu_custom_call.1} parent=59 // pred_check
          %p425 = pneg %p50
        $region62: #{tpu_custom_call.1} parent=59 // pred_check_branch
          %427 = sbr.rel (%p425) target = $region64
        $region63: #{tpu_custom_call.1} parent=59 // pred_region
          %s428 = sand.u32 %s40, 1
          %s429 = scalar_lea.sflag [#allocation3], %s428
          %s430 = sand.u32 %s40, 1
          %s431 = smul.addr %s430, 8
          %s432 = scalar_lea.vmem [#allocation2], %s431
          %s434 = ssub.s32 128, 128
          %435 = vsyncadd %s429, %s434
          %s436 = smul.addr %s30, 128
          %s437 = scalar_lea.hbm %s0, %s436
          %s439 = sshll.u32 %s432, 4
          %s440 = int_to_ptr.vmem [resolvable:$true] %s439
          %442 = dma.hbm_to_vmem [thread:$0]  %s437, 128, %s440, %s429
        $region64: #{tpu_custom_call.1} parent=59 // pred_fallthru
          _
        // Predicated region
        $region65: #{tpu_custom_call.1} parent=59 // pred_check
          %p443 = pneg %p76
        $region66: #{tpu_custom_call.1} parent=59 // pred_check_branch
          %445 = sbr.rel (%p443) target = $region68
        $region67: #{tpu_custom_call.1} parent=59 // pred_region
          %s446 = sand.u32 %s30, 1
          %s447 = scalar_lea.sflag [#allocation6], %s446
          %s448 = sand.u32 %s66, 1
          %s449 = smul.addr %s448, 8
          %s450 = scalar_lea.vmem [#allocation5], %s449
          %s452 = ssub.s32 128, 128
          %453 = vsyncadd %s447, %s452
          %s454 = smul.addr %s30, 128
          %s455 = scalar_lea.hbm %s1, %s454
          %s457 = sshll.u32 %s450, 4
          %s458 = int_to_ptr.vmem [resolvable:$true] %s457
          %460 = dma.hbm_to_vmem [thread:$0]  %s455, 128, %s458, %s447
        $region68: #{tpu_custom_call.1} parent=59 // pred_fallthru
          _
        // Predicated region
        $region69: #{tpu_custom_call.1} parent=59 // pred_check
          %p461 = pneg %p102
        $region70: #{tpu_custom_call.1} parent=59 // pred_check_branch
          %463 = sbr.rel (%p461) target = $region72
        $region71: #{tpu_custom_call.1} parent=59 // pred_region
          %s464 = sand.u32 %s30, 1
          %s465 = scalar_lea.sflag [#allocation6], %s464
          %s466 = sand.u32 %s92, 1
          %s467 = smul.addr %s466, 8
          %s468 = scalar_lea.vmem [#allocation7], %s467
          %s470 = ssub.s32 128, 128
          %471 = vsyncadd %s465, %s470
          %s472 = smul.addr %s30, 128
          %s473 = scalar_lea.hbm %s2, %s472
          %s475 = sshll.u32 %s468, 4
          %s476 = int_to_ptr.vmem [resolvable:$true] %s475
          %478 = dma.hbm_to_vmem [thread:$0]  %s473, 128, %s476, %s465
        $region72: #{tpu_custom_call.1} parent=59 // pred_fallthru
          _
      $region60: #{tpu_custom_call.1} parent=5 // pred_fallthru
        _
      %p479 = scmp.le.s32.totalorder 1, %s30
      %p480 = scmp.lt.s32.totalorder %s30, 3
      %p481 = pnand %p479, %p480
      %p482 = pneg %p481
      // Predicated region
      $region73: #{tpu_custom_call.1} parent=5 // pred_check
        _
      $region74: #{tpu_custom_call.1} parent=5 // pred_check_branch
        %484 = sbr.rel (%p481) target = $region76
      $region75: #{tpu_custom_call.1} parent=5 // pred_region
        %s485 = ssub.s32 %s30, 1
        %s486 = sand.u32 %s43, 1
        %s487 = scalar_lea.sflag [#allocation3], %s486
        %s488 = sand.u32 %s43, 1
        %s489 = smul.addr %s488, 8
        %s490 = scalar_lea.vmem [#allocation2], %s489
        // Predicated region
        $region77: #{tpu_custom_call.1} parent=75 // pred_check
          %p491 = pneg %p56
        $region78: #{tpu_custom_call.1} parent=75 // pred_check_branch
          %493 = sbr.rel (%p491) target = $region80
        $region79: #{tpu_custom_call.1} parent=75 // pred_region
          %494 = dma.done %s487, 128
        $region80: #{tpu_custom_call.1} parent=75 // pred_fallthru
          _
        %s495 = sand.u32 %s35, 1
        %s496 = scalar_lea.sflag [#allocation6], %s495
        %s497 = sand.u32 %s69, 1
        %s498 = smul.addr %s497, 8
        %s499 = scalar_lea.vmem [#allocation5], %s498
        // Predicated region
        $region81: #{tpu_custom_call.1} parent=75 // pred_check
          %p500 = pneg %p82
        $region82: #{tpu_custom_call.1} parent=75 // pred_check_branch
          %502 = sbr.rel (%p500) target = $region84
        $region83: #{tpu_custom_call.1} parent=75 // pred_region
          %503 = dma.done %s496, 128
        $region84: #{tpu_custom_call.1} parent=75 // pred_fallthru
          _
        %s504 = sand.u32 %s35, 1
        %s505 = scalar_lea.sflag [#allocation6], %s504
        %s506 = sand.u32 %s95, 1
        %s507 = smul.addr %s506, 8
        %s508 = scalar_lea.vmem [#allocation7], %s507
        // Predicated region
        $region85: #{tpu_custom_call.1} parent=75 // pred_check
          %p509 = pneg %p108
        $region86: #{tpu_custom_call.1} parent=75 // pred_check_branch
          %511 = sbr.rel (%p509) target = $region88
        $region87: #{tpu_custom_call.1} parent=75 // pred_region
          %512 = dma.done %s505, 128
        $region88: #{tpu_custom_call.1} parent=75 // pred_fallthru
          _
        // Predicated region
        $region89: #{tpu_custom_call.1} parent=75 // pred_check
          %p513 = pneg %p234
        $region90: #{tpu_custom_call.1} parent=75 // pred_check_branch
          %515 = sbr.rel (%p513) target = $region92
        $region91: #{tpu_custom_call.1} parent=75 // pred_region
          %516 = dma.done [#allocation9], 16
        $region92: #{tpu_custom_call.1} parent=75 // pred_fallthru
          _
        %s517 = sand.u32 %s43, 1
        %s518 = scalar_lea.sflag [#allocation3], %s517
        %s519 = sand.u32 %s43, 1
        %s520 = smul.addr %s519, 8
        %s521 = scalar_lea.vmem [#allocation2], %s520
        %p522 = pneg %p56
        %p523 = pneg %p53
        %s524 = sand.u32 %s35, 1
        %s525 = scalar_lea.sflag [#allocation6], %s524
        %s526 = sand.u32 %s69, 1
        %s527 = smul.addr %s526, 8
        %s528 = scalar_lea.vmem [#allocation5], %s527
        %p529 = pneg %p82
        %p530 = pneg %p79
        %s531 = sand.u32 %s35, 1
        %s532 = scalar_lea.sflag [#allocation6], %s531
        %s533 = sand.u32 %s95, 1
        %s534 = smul.addr %s533, 8
        %s535 = scalar_lea.vmem [#allocation7], %s534
        %p536 = pneg %p108
        %p537 = pneg %p105
        %p538 = pneg %p129
        %p539 = pneg %p126
        %p540 = pneg %p150
        %p541 = pneg %p147
        %p542 = pneg %p171
        %p543 = pneg %p168
        %p544 = pneg %p192
        %p545 = pneg %p189
        %p546 = pneg %p213
        %p547 = pneg %p210
        %p548 = pneg %p234
        %p549 = pneg %p231
        %p550 = pneg %p255
        %p551 = pneg %p252
        %p552 = pneg %p276
        %p553 = pneg %p273
        %p554 = pneg %p297
        %p555 = pneg %p294
        %p556 = pneg %p318
        %p557 = pneg %p315
        %p558 = pneg %p339
        %p559 = pneg %p336
        %p560 = pneg %p365
        %p561 = pneg %p362
        %s562 = sand.u32 %s352, 1
        %s563 = scalar_lea.sflag [#allocation4], %s562
        %s564 = sand.u32 %s352, 1
        %s565 = smul.addr %s564, 8
        %s566 = scalar_lea.vmem [#allocation10], %s565
        %v568 = vld [vmem:[%s490] sm:$0xff]
        %v569 = vpack.c.bf16 %v568, %v568
        %v570 = vld [vmem:[%s499] sm:$0xff]
        %v571 = vpack.c.bf16 %v570, %v570
        %v572 = vld [vmem:[%s508] sm:$0xff]
        %v573 = vpack.c.bf16 %v572, %v572
        %v574 = vld [vmem:[%s3] sm:$0xf]
        %v575 = vld [vmem:[%s3 + $0x4] sm:$0xf]
        %v576 = vld [vmem:[%s3 + $0x8] sm:$0xf]
        %v577 = vld [vmem:[%s3 + $0xc] sm:$0xf]
        %v578 = vld [vmem:[%s4] sm:$0x1]
        %v580 = vlaneseq
        %v581 = vshrl.u32 %v580, 7
        %v582 = vsub.s32 0, %v581
        %v583 = vrot.slane %v578, %v582
        %v589 = vunpack.c.l.b16 %v574
        %v590 = vunpack.c.l.b16 %v575
        %v591 = vunpack.c.l.b16 %v576
        %v592 = vunpack.c.l.b16 %v577
        %v593 = vpack.c.b16 %v590, %v589
        %v594 = vpack.c.b16 %v592, %v591
        %vm597 = vcmask 261120
        %v599 = vsel %vm597, %v569, 0
        %601 = vmatprep.subr.bf16.mxu0 0
        %602 = vmatpush1.bf16.msra.mxu0 %v593
        %603 = vmatprep.subr.bf16.mxu0 0
        %604 = vmatpush1.bf16.msra.mxu0 %v594
        %605 = vmatprep.subr.bf16.mxu0 0
        %606 = vmatpush1.bf16.msra.mxu0 0
        %607 = vmatprep.subr.bf16.mxu0 0
        %608 = vmatpush1.bf16.msra.mxu0 0
        %609 = vmatprep.subr.bf16.mxu0 0
        %610 = vmatpush1.bf16.msra.mxu0 0
        %611 = vmatprep.subr.bf16.mxu0 0
        %612 = vmatpush1.bf16.msra.mxu0 0
        %613 = vmatprep.subr.bf16.mxu0 0
        %614 = vmatpush1.bf16.msra.mxu0 0
        %615 = vmatprep.subr.bf16.mxu0 0
        %616 = vmatpush1.bf16.msra.mxu0 0
        %617 = vmatprep.subr.bf16.mxu0 0
        %618 = vmatpush1.bf16.msra.mxu0 0
        %619 = vmatprep.subr.bf16.mxu0 0
        %620 = vmatpush1.bf16.msra.mxu0 0
        %621 = vmatprep.subr.bf16.mxu0 0
        %622 = vmatpush1.bf16.msra.mxu0 0
        %623 = vmatprep.subr.bf16.mxu0 0
        %624 = vmatpush1.bf16.msra.mxu0 0
        %625 = vmatprep.subr.bf16.mxu0 0
        %626 = vmatpush1.bf16.msra.mxu0 0
        %627 = vmatprep.subr.bf16.mxu0 0
        %628 = vmatpush1.bf16.msra.mxu0 0
        %629 = vmatprep.subr.bf16.mxu0 0
        %630 = vmatpush1.bf16.msra.mxu0 0
        %631 = vmatprep.subr.bf16.mxu0 0
        %632 = vmatpush1.bf16.msra.mxu0 0
        %633 = vmatprep.mubr.bf16.mxu0 0
        %634 = vmatmul.mubr.bf16.gmra.mrb[0].mxu0 %v599
        %v635 = vpop.f32.mrb[0].mxu0
        %v636 = vadd.f32 %v583, %v635
        %v637 = vpop.f32.mrb[0].mxu0
        %v638 = vpop.f32.mrb[0].mxu0
        %v639 = vpop.f32.mrb[0].mxu0
        %640 = vdwg.mxu0
        %v641 = vld [vmem:[%s5] sm:$0xf]
        %v642 = vld [vmem:[%s5 + $0x4] sm:$0xf]
        %v643 = vld [vmem:[%s5 + $0x8] sm:$0xf]
        %v644 = vld [vmem:[%s5 + $0xc] sm:$0xf]
        %v645 = vld [vmem:[%s5 + $0x10] sm:$0xf]
        %v646 = vld [vmem:[%s5 + $0x14] sm:$0xf]
        %v647 = vld [vmem:[%s5 + $0x18] sm:$0xf]
        %v648 = vld [vmem:[%s5 + $0x1c] sm:$0xf]
        %v649 = vld [vmem:[%s5 + $0x20] sm:$0xf]
        %v650 = vld [vmem:[%s5 + $0x24] sm:$0xf]
        %v651 = vld [vmem:[%s5 + $0x28] sm:$0xf]
        %v652 = vld [vmem:[%s5 + $0x2c] sm:$0xf]
        %v653 = vld [vmem:[%s5 + $0x30] sm:$0xf]
        %v654 = vld [vmem:[%s5 + $0x34] sm:$0xf]
        %v655 = vld [vmem:[%s5 + $0x38] sm:$0xf]
        %v656 = vld [vmem:[%s5 + $0x3c] sm:$0xf]
        %v657 = vld [vmem:[%s6] sm:$0x1]
        %v659 = vlaneseq
        %v660 = vshrl.u32 %v659, 7
        %v661 = vsub.s32 0, %v660
        %v662 = vrot.slane %v657, %v661
        %v680 = vunpack.c.l.b16 %v641
        %v681 = vunpack.c.l.b16 %v642
        %v682 = vunpack.c.l.b16 %v643
        %v683 = vunpack.c.l.b16 %v644
        %v684 = vunpack.c.l.b16 %v645
        %v685 = vunpack.c.l.b16 %v646
        %v686 = vunpack.c.l.b16 %v647
        %v687 = vunpack.c.l.b16 %v648
        %v688 = vunpack.c.l.b16 %v649
        %v689 = vunpack.c.l.b16 %v650
        %v690 = vunpack.c.l.b16 %v651
        %v691 = vunpack.c.l.b16 %v652
        %v692 = vunpack.c.l.b16 %v653
        %v693 = vunpack.c.l.b16 %v654
        %v694 = vunpack.c.l.b16 %v655
        %v695 = vunpack.c.l.b16 %v656
        %v696 = vpack.c.b16 %v681, %v680
        %v697 = vpack.c.b16 %v683, %v682
        %v698 = vpack.c.b16 %v685, %v684
        %v699 = vpack.c.b16 %v687, %v686
        %v700 = vpack.c.b16 %v689, %v688
        %v701 = vpack.c.b16 %v691, %v690
        %v702 = vpack.c.b16 %v693, %v692
        %v703 = vpack.c.b16 %v695, %v694
        %712 = vmatprep.subr.bf16.mxu0 0
        %713 = vmatpush1.bf16.msra.mxu0 %v696
        %714 = vmatprep.subr.bf16.mxu0 0
        %715 = vmatpush1.bf16.msra.mxu0 %v697
        %716 = vmatprep.subr.bf16.mxu0 0
        %717 = vmatpush1.bf16.msra.mxu0 %v698
        %718 = vmatprep.subr.bf16.mxu0 0
        %719 = vmatpush1.bf16.msra.mxu0 %v699
        %720 = vmatprep.subr.bf16.mxu0 0
        %721 = vmatpush1.bf16.msra.mxu0 %v700
        %722 = vmatprep.subr.bf16.mxu0 0
        %723 = vmatpush1.bf16.msra.mxu0 %v701
        %724 = vmatprep.subr.bf16.mxu0 0
        %725 = vmatpush1.bf16.msra.mxu0 %v702
        %726 = vmatprep.subr.bf16.mxu0 0
        %727 = vmatpush1.bf16.msra.mxu0 %v703
        %728 = vmatprep.subr.bf16.mxu0 0
        %729 = vmatpush1.bf16.msra.mxu0 0
        %730 = vmatprep.subr.bf16.mxu0 0
        %731 = vmatpush1.bf16.msra.mxu0 0
        %732 = vmatprep.subr.bf16.mxu0 0
        %733 = vmatpush1.bf16.msra.mxu0 0
        %734 = vmatprep.subr.bf16.mxu0 0
        %735 = vmatpush1.bf16.msra.mxu0 0
        %736 = vmatprep.subr.bf16.mxu0 0
        %737 = vmatpush1.bf16.msra.mxu0 0
        %738 = vmatprep.subr.bf16.mxu0 0
        %739 = vmatpush1.bf16.msra.mxu0 0
        %740 = vmatprep.subr.bf16.mxu0 0
        %741 = vmatpush1.bf16.msra.mxu0 0
        %742 = vmatprep.subr.bf16.mxu0 0
        %743 = vmatpush1.bf16.msra.mxu0 0
        %744 = vmatprep.mubr.bf16.mxu0 0
        %745 = vmatmul.mubr.bf16.gmra.mrb[0].mxu0 %v571
        %v746 = vpop.f32.mrb[0].mxu0
        %v747 = vadd.f32 %v662, %v746
        %v748 = vpop.f32.mrb[0].mxu0
        %v749 = vpop.f32.mrb[0].mxu0
        %v750 = vpop.f32.mrb[0].mxu0
        %751 = vdwg.mxu0
        %v752 = vld [vmem:[%s7] sm:$0xf]
        %v753 = vld [vmem:[%s7 + $0x4] sm:$0xf]
        %v754 = vld [vmem:[%s7 + $0x8] sm:$0xf]
        %v755 = vld [vmem:[%s7 + $0xc] sm:$0xf]
        %v756 = vld [vmem:[%s7 + $0x10] sm:$0xf]
        %v757 = vld [vmem:[%s7 + $0x14] sm:$0xf]
        %v758 = vld [vmem:[%s7 + $0x18] sm:$0xf]
        %v759 = vld [vmem:[%s7 + $0x1c] sm:$0xf]
        %v760 = vld [vmem:[%s7 + $0x20] sm:$0xf]
        %v761 = vld [vmem:[%s7 + $0x24] sm:$0xf]
        %v762 = vld [vmem:[%s7 + $0x28] sm:$0xf]
        %v763 = vld [vmem:[%s7 + $0x2c] sm:$0xf]
        %v764 = vld [vmem:[%s7 + $0x30] sm:$0xf]
        %v765 = vld [vmem:[%s7 + $0x34] sm:$0xf]
        %v766 = vld [vmem:[%s7 + $0x38] sm:$0xf]
        %v767 = vld [vmem:[%s7 + $0x3c] sm:$0xf]
        %v768 = vld [vmem:[#allocation8] sm:$0x1]
        %v770 = vlaneseq
        %v771 = vshrl.u32 %v770, 7
        %v772 = vsub.s32 0, %v771
        %v773 = vrot.slane %v768, %v772
        %v791 = vunpack.c.l.b16 %v752
        %v792 = vunpack.c.l.b16 %v753
        %v793 = vunpack.c.l.b16 %v754
        %v794 = vunpack.c.l.b16 %v755
        %v795 = vunpack.c.l.b16 %v756
        %v796 = vunpack.c.l.b16 %v757
        %v797 = vunpack.c.l.b16 %v758
        %v798 = vunpack.c.l.b16 %v759
        %v799 = vunpack.c.l.b16 %v760
        %v800 = vunpack.c.l.b16 %v761
        %v801 = vunpack.c.l.b16 %v762
        %v802 = vunpack.c.l.b16 %v763
        %v803 = vunpack.c.l.b16 %v764
        %v804 = vunpack.c.l.b16 %v765
        %v805 = vunpack.c.l.b16 %v766
        %v806 = vunpack.c.l.b16 %v767
        %v807 = vpack.c.b16 %v792, %v791
        %v808 = vpack.c.b16 %v794, %v793
        %v809 = vpack.c.b16 %v796, %v795
        %v810 = vpack.c.b16 %v798, %v797
        %v811 = vpack.c.b16 %v800, %v799
        %v812 = vpack.c.b16 %v802, %v801
        %v813 = vpack.c.b16 %v804, %v803
        %v814 = vpack.c.b16 %v806, %v805
        %823 = vmatprep.subr.bf16.mxu0 0
        %824 = vmatpush1.bf16.msra.mxu0 %v807
        %825 = vmatprep.subr.bf16.mxu0 0
        %826 = vmatpush1.bf16.msra.mxu0 %v808
        %827 = vmatprep.subr.bf16.mxu0 0
        %828 = vmatpush1.bf16.msra.mxu0 %v809
        %829 = vmatprep.subr.bf16.mxu0 0
        %830 = vmatpush1.bf16.msra.mxu0 %v810
        %831 = vmatprep.subr.bf16.mxu0 0
        %832 = vmatpush1.bf16.msra.mxu0 %v811
        %833 = vmatprep.subr.bf16.mxu0 0
        %834 = vmatpush1.bf16.msra.mxu0 %v812
        %835 = vmatprep.subr.bf16.mxu0 0
        %836 = vmatpush1.bf16.msra.mxu0 %v813
        %837 = vmatprep.subr.bf16.mxu0 0
        %838 = vmatpush1.bf16.msra.mxu0 %v814
        %839 = vmatprep.subr.bf16.mxu0 0
        %840 = vmatpush1.bf16.msra.mxu0 0
        %841 = vmatprep.subr.bf16.mxu0 0
        %842 = vmatpush1.bf16.msra.mxu0 0
        %843 = vmatprep.subr.bf16.mxu0 0
        %844 = vmatpush1.bf16.msra.mxu0 0
        %845 = vmatprep.subr.bf16.mxu0 0
        %846 = vmatpush1.bf16.msra.mxu0 0
        %847 = vmatprep.subr.bf16.mxu0 0
        %848 = vmatpush1.bf16.msra.mxu0 0
        %849 = vmatprep.subr.bf16.mxu0 0
        %850 = vmatpush1.bf16.msra.mxu0 0
        %851 = vmatprep.subr.bf16.mxu0 0
        %852 = vmatpush1.bf16.msra.mxu0 0
        %853 = vmatprep.subr.bf16.mxu0 0
        %854 = vmatpush1.bf16.msra.mxu0 0
        %855 = vmatprep.mubr.bf16.mxu0 0
        %856 = vmatmul.mubr.bf16.gmra.mrb[0].mxu0 %v573
        %v857 = vpop.f32.mrb[0].mxu0
        %v858 = vadd.f32 %v773, %v857
        %v859 = vpop.f32.mrb[0].mxu0
        %v860 = vpop.f32.mrb[0].mxu0
        %v861 = vpop.f32.mrb[0].mxu0
        %862 = vdwg.mxu0
        %v863 = vmul.f32 %v636, %v747
        %v864 = vpack.c.bf16 %v863, %v863
        %v865 = vld [vmem:[%s9] sm:$0xf]
        %v866 = vld [vmem:[%s9 + $0x4] sm:$0xf]
        %v867 = vld [vmem:[%s9 + $0x8] sm:$0xf]
        %v868 = vld [vmem:[%s9 + $0xc] sm:$0xf]
        %v869 = vld [vmem:[%s9 + $0x10] sm:$0xf]
        %v870 = vld [vmem:[%s9 + $0x14] sm:$0xf]
        %v871 = vld [vmem:[%s9 + $0x18] sm:$0xf]
        %v872 = vld [vmem:[%s9 + $0x1c] sm:$0xf]
        %v873 = vld [vmem:[%s9 + $0x20] sm:$0xf]
        %v874 = vld [vmem:[%s9 + $0x24] sm:$0xf]
        %v875 = vld [vmem:[%s9 + $0x28] sm:$0xf]
        %v876 = vld [vmem:[%s9 + $0x2c] sm:$0xf]
        %v877 = vld [vmem:[%s9 + $0x30] sm:$0xf]
        %v878 = vld [vmem:[%s9 + $0x34] sm:$0xf]
        %v879 = vld [vmem:[%s9 + $0x38] sm:$0xf]
        %v880 = vld [vmem:[%s9 + $0x3c] sm:$0xf]
        %v897 = vunpack.c.l.b16 %v865
        %v898 = vunpack.c.l.b16 %v866
        %v899 = vunpack.c.l.b16 %v867
        %v900 = vunpack.c.l.b16 %v868
        %v901 = vunpack.c.l.b16 %v869
        %v902 = vunpack.c.l.b16 %v870
        %v903 = vunpack.c.l.b16 %v871
        %v904 = vunpack.c.l.b16 %v872
        %v905 = vunpack.c.l.b16 %v873
        %v906 = vunpack.c.l.b16 %v874
        %v907 = vunpack.c.l.b16 %v875
        %v908 = vunpack.c.l.b16 %v876
        %v909 = vunpack.c.l.b16 %v877
        %v910 = vunpack.c.l.b16 %v878
        %v911 = vunpack.c.l.b16 %v879
        %v912 = vunpack.c.l.b16 %v880
        %v913 = vpack.c.b16 %v898, %v897
        %v914 = vpack.c.b16 %v900, %v899
        %v915 = vpack.c.b16 %v902, %v901
        %v916 = vpack.c.b16 %v904, %v903
        %v917 = vpack.c.b16 %v906, %v905
        %v918 = vpack.c.b16 %v908, %v907
        %v919 = vpack.c.b16 %v910, %v909
        %v920 = vpack.c.b16 %v912, %v911
        %929 = vmatprep.subr.bf16.mxu0 0
        %930 = vmatpush1.bf16.msra.mxu0 %v913
        %931 = vmatprep.subr.bf16.mxu0 0
        %932 = vmatpush1.bf16.msra.mxu0 %v914
        %933 = vmatprep.subr.bf16.mxu0 0
        %934 = vmatpush1.bf16.msra.mxu0 %v915
        %935 = vmatprep.subr.bf16.mxu0 0
        %936 = vmatpush1.bf16.msra.mxu0 %v916
        %937 = vmatprep.subr.bf16.mxu0 0
        %938 = vmatpush1.bf16.msra.mxu0 %v917
        %939 = vmatprep.subr.bf16.mxu0 0
        %940 = vmatpush1.bf16.msra.mxu0 %v918
        %941 = vmatprep.subr.bf16.mxu0 0
        %942 = vmatpush1.bf16.msra.mxu0 %v919
        %943 = vmatprep.subr.bf16.mxu0 0
        %944 = vmatpush1.bf16.msra.mxu0 %v920
        %945 = vmatprep.subr.bf16.mxu0 0
        %946 = vmatpush1.bf16.msra.mxu0 0
        %947 = vmatprep.subr.bf16.mxu0 0
        %948 = vmatpush1.bf16.msra.mxu0 0
        %949 = vmatprep.subr.bf16.mxu0 0
        %950 = vmatpush1.bf16.msra.mxu0 0
        %951 = vmatprep.subr.bf16.mxu0 0
        %952 = vmatpush1.bf16.msra.mxu0 0
        %953 = vmatprep.subr.bf16.mxu0 0
        %954 = vmatpush1.bf16.msra.mxu0 0
        %955 = vmatprep.subr.bf16.mxu0 0
        %956 = vmatpush1.bf16.msra.mxu0 0
        %957 = vmatprep.subr.bf16.mxu0 0
        %958 = vmatpush1.bf16.msra.mxu0 0
        %959 = vmatprep.subr.bf16.mxu0 0
        %960 = vmatpush1.bf16.msra.mxu0 0
        %961 = vmatprep.mubr.bf16.mxu0 0
        %962 = vmatmul.mubr.bf16.gmra.mrb[0].mxu0 %v864
        %v963 = vpop.f32.mrb[0].mxu0
        %v964 = vadd.f32 0.0, %v963
        %v965 = vpop.f32.mrb[0].mxu0
        %v966 = vpop.f32.mrb[0].mxu0
        %v967 = vpop.f32.mrb[0].mxu0
        %968 = vdwg.mxu0
        %v969 = vmul.f32 %v964, 0.35355338
        %vm970 = vcmask 130048
        %v971 = vsel %vm970, %v969, -inf
        %972 = vmax.xlane.f32.xlu0 %v971
        %v973 = vpop.xlane.xlu0 %972
        %v974 = vsub.f32 %v969, %v973
        %v975 = vmul.f32 %v974, 1.442695
        %v976 = vpow.pop %v975
        %v977 = vpack.c.bf16 %v976, %v976
        %v978 = vld [vmem:[%s10] sm:$0xf]
        %v979 = vld [vmem:[%s10 + $0x4] sm:$0xf]
        %v982 = vunpack.c.l.b16 %v978
        %v983 = vunpack.c.l.b16 %v979
        %v984 = vpack.c.b16 %v983, %v982
        %v987 = vsel %vm970, %v977, 0
        %989 = vmatprep.subr.bf16.mxu0 0
        %990 = vmatpush1.bf16.msra.mxu0 %v984
        %991 = vmatprep.subr.bf16.mxu0 0
        %992 = vmatpush1.bf16.msra.mxu0 0
        %993 = vmatprep.subr.bf16.mxu0 0
        %994 = vmatpush1.bf16.msra.mxu0 0
        %995 = vmatprep.subr.bf16.mxu0 0
        %996 = vmatpush1.bf16.msra.mxu0 0
        %997 = vmatprep.subr.bf16.mxu0 0
        %998 = vmatpush1.bf16.msra.mxu0 0
        %999 = vmatprep.subr.bf16.mxu0 0
        %1000 = vmatpush1.bf16.msra.mxu0 0
        %1001 = vmatprep.subr.bf16.mxu0 0
        %1002 = vmatpush1.bf16.msra.mxu0 0
        %1003 = vmatprep.subr.bf16.mxu0 0
        %1004 = vmatpush1.bf16.msra.mxu0 0
        %1005 = vmatprep.subr.bf16.mxu0 0
        %1006 = vmatpush1.bf16.msra.mxu0 0
        %1007 = vmatprep.subr.bf16.mxu0 0
        %1008 = vmatpush1.bf16.msra.mxu0 0
        %1009 = vmatprep.subr.bf16.mxu0 0
        %1010 = vmatpush1.bf16.msra.mxu0 0
        %1011 = vmatprep.subr.bf16.mxu0 0
        %1012 = vmatpush1.bf16.msra.mxu0 0
        %1013 = vmatprep.subr.bf16.mxu0 0
        %1014 = vmatpush1.bf16.msra.mxu0 0
        %1015 = vmatprep.subr.bf16.mxu0 0
        %1016 = vmatpush1.bf16.msra.mxu0 0
        %1017 = vmatprep.subr.bf16.mxu0 0
        %1018 = vmatpush1.bf16.msra.mxu0 0
        %1019 = vmatprep.subr.bf16.mxu0 0
        %1020 = vmatpush1.bf16.msra.mxu0 0
        %1021 = vmatprep.mubr.bf16.mxu0 0
        %1022 = vmatmul.mubr.bf16.gmra.mrb[0].mxu0 %v987
        %v1023 = vpop.f32.mrb[0].mxu0
        %v1024 = vadd.f32 0.0, %v1023
        %v1025 = vpop.f32.mrb[0].mxu0
        %v1026 = vpop.f32.mrb[0].mxu0
        %v1027 = vpop.f32.mrb[0].mxu0
        %1028 = vdwg.mxu0
        %v1029 = vmax.f32 %v1024, 1e-30
        %v1030 = vrcp.pop %v1029
        %v1031 = vmul.f32 %v976, %v1030
        %v1032 = vpack.c.bf16 %v1031, %v1031
        %v1033 = vld [vmem:[%s11] sm:$0xf]
        %v1034 = vld [vmem:[%s11 + $0x4] sm:$0xf]
        %v1037 = vunpack.c.l.b16 %v1033
        %v1038 = vunpack.c.l.b16 %v1034
        %v1039 = vpack.c.b16 %v1038, %v1037
        %v1042 = vsel %vm970, %v1032, 0
        %1044 = vmatprep.subr.bf16.mxu0 0
        %1045 = vmatpush1.bf16.msra.mxu0 %v1039
        %1046 = vmatprep.subr.bf16.mxu0 0
        %1047 = vmatpush1.bf16.msra.mxu0 0
        %1048 = vmatprep.subr.bf16.mxu0 0
        %1049 = vmatpush1.bf16.msra.mxu0 0
        %1050 = vmatprep.subr.bf16.mxu0 0
        %1051 = vmatpush1.bf16.msra.mxu0 0
        %1052 = vmatprep.subr.bf16.mxu0 0
        %1053 = vmatpush1.bf16.msra.mxu0 0
        %1054 = vmatprep.subr.bf16.mxu0 0
        %1055 = vmatpush1.bf16.msra.mxu0 0
        %1056 = vmatprep.subr.bf16.mxu0 0
        %1057 = vmatpush1.bf16.msra.mxu0 0
        %1058 = vmatprep.subr.bf16.mxu0 0
        %1059 = vmatpush1.bf16.msra.mxu0 0
        %1060 = vmatprep.subr.bf16.mxu0 0
        %1061 = vmatpush1.bf16.msra.mxu0 0
        %1062 = vmatprep.subr.bf16.mxu0 0
        %1063 = vmatpush1.bf16.msra.mxu0 0
        %1064 = vmatprep.subr.bf16.mxu0 0
        %1065 = vmatpush1.bf16.msra.mxu0 0
        %1066 = vmatprep.subr.bf16.mxu0 0
        %1067 = vmatpush1.bf16.msra.mxu0 0
        %1068 = vmatprep.subr.bf16.mxu0 0
        %1069 = vmatpush1.bf16.msra.mxu0 0
        %1070 = vmatprep.subr.bf16.mxu0 0
        %1071 = vmatpush1.bf16.msra.mxu0 0
        %1072 = vmatprep.subr.bf16.mxu0 0
        %1073 = vmatpush1.bf16.msra.mxu0 0
        %1074 = vmatprep.subr.bf16.mxu0 0
        %1075 = vmatpush1.bf16.msra.mxu0 0
        %1076 = vmatprep.mubr.bf16.mxu0 0
        %1077 = vmatmul.mubr.bf16.gmra.mrb[0].mxu0 %v1042
        %v1078 = vpop.f32.mrb[0].mxu0
        %v1079 = vadd.f32 0.0, %v1078
        %v1080 = vpop.f32.mrb[0].mxu0
        %v1081 = vpop.f32.mrb[0].mxu0
        %v1082 = vpop.f32.mrb[0].mxu0
        %1083 = vdwg.mxu0
        %v1084 = vmul.f32 %v1079, %v858
        %v1085 = vpack.c.bf16 %v1084, %v1084
        %v1086 = vld [vmem:[%s12] sm:$0xf]
        %v1087 = vld [vmem:[%s12 + $0x4] sm:$0xf]
        %v1088 = vld [vmem:[%s12 + $0x8] sm:$0xf]
        %v1089 = vld [vmem:[%s12 + $0xc] sm:$0xf]
        %v1090 = vld [vmem:[%s12 + $0x10] sm:$0xf]
        %v1091 = vld [vmem:[%s12 + $0x14] sm:$0xf]
        %v1092 = vld [vmem:[%s12 + $0x18] sm:$0xf]
        %v1093 = vld [vmem:[%s12 + $0x1c] sm:$0xf]
        %v1094 = vld [vmem:[%s12 + $0x20] sm:$0xf]
        %v1095 = vld [vmem:[%s12 + $0x24] sm:$0xf]
        %v1096 = vld [vmem:[%s12 + $0x28] sm:$0xf]
        %v1097 = vld [vmem:[%s12 + $0x2c] sm:$0xf]
        %v1098 = vld [vmem:[%s12 + $0x30] sm:$0xf]
        %v1099 = vld [vmem:[%s12 + $0x34] sm:$0xf]
        %v1100 = vld [vmem:[%s12 + $0x38] sm:$0xf]
        %v1101 = vld [vmem:[%s12 + $0x3c] sm:$0xf]
        %v1102 = vld [vmem:[%s13] sm:$0x1]
        %v1104 = vlaneseq
        %v1105 = vshrl.u32 %v1104, 7
        %v1106 = vsub.s32 0, %v1105
        %v1107 = vrot.slane %v1102, %v1106
        %v1125 = vunpack.c.l.b16 %v1086
        %v1126 = vunpack.c.l.b16 %v1087
        %v1127 = vunpack.c.l.b16 %v1088
        %v1128 = vunpack.c.l.b16 %v1089
        %v1129 = vunpack.c.l.b16 %v1090
        %v1130 = vunpack.c.l.b16 %v1091
        %v1131 = vunpack.c.l.b16 %v1092
        %v1132 = vunpack.c.l.b16 %v1093
        %v1133 = vunpack.c.l.b16 %v1094
        %v1134 = vunpack.c.l.b16 %v1095
        %v1135 = vunpack.c.l.b16 %v1096
        %v1136 = vunpack.c.l.b16 %v1097
        %v1137 = vunpack.c.l.b16 %v1098
        %v1138 = vunpack.c.l.b16 %v1099
        %v1139 = vunpack.c.l.b16 %v1100
        %v1140 = vunpack.c.l.b16 %v1101
        %v1141 = vpack.c.b16 %v1126, %v1125
        %v1142 = vpack.c.b16 %v1128, %v1127
        %v1143 = vpack.c.b16 %v1130, %v1129
        %v1144 = vpack.c.b16 %v1132, %v1131
        %v1145 = vpack.c.b16 %v1134, %v1133
        %v1146 = vpack.c.b16 %v1136, %v1135
        %v1147 = vpack.c.b16 %v1138, %v1137
        %v1148 = vpack.c.b16 %v1140, %v1139
        %1157 = vmatprep.subr.bf16.mxu0 0
        %1158 = vmatpush1.bf16.msra.mxu0 %v1141
        %1159 = vmatprep.subr.bf16.mxu0 0
        %1160 = vmatpush1.bf16.msra.mxu0 %v1142
        %1161 = vmatprep.subr.bf16.mxu0 0
        %1162 = vmatpush1.bf16.msra.mxu0 %v1143
        %1163 = vmatprep.subr.bf16.mxu0 0
        %1164 = vmatpush1.bf16.msra.mxu0 %v1144
        %1165 = vmatprep.subr.bf16.mxu0 0
        %1166 = vmatpush1.bf16.msra.mxu0 %v1145
        %1167 = vmatprep.subr.bf16.mxu0 0
        %1168 = vmatpush1.bf16.msra.mxu0 %v1146
        %1169 = vmatprep.subr.bf16.mxu0 0
        %1170 = vmatpush1.bf16.msra.mxu0 %v1147
        %1171 = vmatprep.subr.bf16.mxu0 0
        %1172 = vmatpush1.bf16.msra.mxu0 %v1148
        %1173 = vmatprep.subr.bf16.mxu0 0
        %1174 = vmatpush1.bf16.msra.mxu0 0
        %1175 = vmatprep.subr.bf16.mxu0 0
        %1176 = vmatpush1.bf16.msra.mxu0 0
        %1177 = vmatprep.subr.bf16.mxu0 0
        %1178 = vmatpush1.bf16.msra.mxu0 0
        %1179 = vmatprep.subr.bf16.mxu0 0
        %1180 = vmatpush1.bf16.msra.mxu0 0
        %1181 = vmatprep.subr.bf16.mxu0 0
        %1182 = vmatpush1.bf16.msra.mxu0 0
        %1183 = vmatprep.subr.bf16.mxu0 0
        %1184 = vmatpush1.bf16.msra.mxu0 0
        %1185 = vmatprep.subr.bf16.mxu0 0
        %1186 = vmatpush1.bf16.msra.mxu0 0
        %1187 = vmatprep.subr.bf16.mxu0 0
        %1188 = vmatpush1.bf16.msra.mxu0 0
        %1189 = vmatprep.mubr.bf16.mxu0 0
        %1190 = vmatmul.mubr.bf16.gmra.mrb[0].mxu0 %v1085
        %v1191 = vpop.f32.mrb[0].mxu0
        %v1192 = vadd.f32 %v1107, %v1191
        %v1193 = vpop.f32.mrb[0].mxu0
        %v1194 = vpop.f32.mrb[0].mxu0
        %v1195 = vpop.f32.mrb[0].mxu0
        %1196 = vdwg.mxu0
        %1197 = vst.msk [vmem:[%s566] sm:$0xff] %vm597, %v1192
        %s1198 = sand.u32 %s352, 1
        %s1199 = scalar_lea.sflag [#allocation4], %s1198
        %s1200 = sand.u32 %s352, 1
        %s1201 = smul.addr %s1200, 8
        %s1202 = scalar_lea.vmem [#allocation10], %s1201
        // Predicated region
        $region93: #{tpu_custom_call.1} parent=75 // pred_check
          %p1203 = pneg %p362
        $region94: #{tpu_custom_call.1} parent=75 // pred_check_branch
          %1205 = sbr.rel (%p1203) target = $region96
        $region95: #{tpu_custom_call.1} parent=75 // pred_region
          %s1207 = ssub.s32 128, 128
          %1208 = vsyncadd %s1199, %s1207
          %s1209 = smul.addr %s35, 128
          %s1210 = scalar_lea.hbm %s14, %s1209
          %s1212 = sshll.u32 %s1202, 4
          %s1213 = int_to_ptr.vmem [resolvable:$true] %s1212
          %1215 = dma.vmem_to_hbm [thread:$0]  %s1213, 128, %s1210, %s1199
        $region96: #{tpu_custom_call.1} parent=75 // pred_fallthru
          _
      $region76: #{tpu_custom_call.1} parent=5 // pred_fallthru
        _
      %p1216 = scmp.le.s32.totalorder 2, %s30
      // Predicated region
      $region97: #{tpu_custom_call.1} parent=5 // pred_check
        %p1217 = pneg %p1216
      $region98: #{tpu_custom_call.1} parent=5 // pred_check_branch
        %1219 = sbr.rel (%p1217) target = $region100
      $region99: #{tpu_custom_call.1} parent=5 // pred_region
        %s1220 = ssub.s32 %s30, 2
        // Predicated region
        $region101: #{tpu_custom_call.1} parent=99 // pred_check
          %p1221 = pneg %p368
        $region102: #{tpu_custom_call.1} parent=99 // pred_check_branch
          %1223 = sbr.rel (%p1221) target = $region104
        $region103: #{tpu_custom_call.1} parent=99 // pred_region
          %s1224 = sand.u32 %s353, 1
          %s1225 = scalar_lea.sflag [#allocation4], %s1224
          %s1226 = sand.u32 %s353, 1
          %s1227 = smul.addr %s1226, 8
          %s1228 = scalar_lea.vmem [#allocation10], %s1227
          %1229 = dma.done %s1225, 128
        $region104: #{tpu_custom_call.1} parent=99 // pred_fallthru
          _
      $region100: #{tpu_custom_call.1} parent=5 // pred_fallthru
        _
    $region6: #{tpu_custom_call.1} parent=1 // loop_footer
      %s34 = sadd.s32 1, %s30
    $region7: #{tpu_custom_call.1} parent=1 // loop_footer_branch
      %29 = sbr.rel target = $region3
    $region8: #{tpu_custom_call.1} parent=1 // loop_exit
      _
    %1230 = vsyncpa [#allocation3], 1
    %s1231 = scalar_lea.sflag [#allocation3], 1
    %1232 = vsyncpa %s1231, 1
    %1233 = vsyncpa [#allocation6], 1
    %s1234 = scalar_lea.sflag [#allocation6], 1
    %1235 = vsyncpa %s1234, 1
    %1236 = vsyncpa [#allocation9], 1
    %1237 = vsyncpa [#allocation4], 1
    %s1238 = scalar_lea.sflag [#allocation4], 1
    %1239 = vsyncpa %s1238, 1

</llo_original>
